<compile_context>
chip_gen: v7x
topology: tpu7x:2x2x1
jax: 0.10.0
libtpu: 0.0.40
codegen_flags: <defaults>
</compile_context>

<pallas_src>
import jax
import jax.numpy as jnp
from jax.experimental import pallas as pl
from jax.experimental.pallas import tpu as pltpu

# ---- small synthetic config (shapes consistent with the module) -------------
N_PROMPTS = 2      # number of prompts      (the "10" in the docstring)
SEQ = 8            # context length         (the "77")
DIM = 32           # transformer width      (the "512")
HEADS = 4
HEAD_DIM = DIM // HEADS
LAYERS = 2
PROJ_DIM = 16      # text_projection output dim
PROJ_PAD = 128     # lane-dense padded projection width (sliced back outside)
NL = N_PROMPTS * SEQ
EPS = 1e-5
NEG_INF = -1e30


# =============================== kernel ======================================
def _layernorm(x, g, b):
    mu = jnp.mean(x, axis=-1, keepdims=True)
    var = jnp.mean(jnp.square(x - mu), axis=-1, keepdims=True)
    return (x - mu) * jax.lax.rsqrt(var + EPS) * g + b


def encoder_kernel(eot_ref,                                     # scalar prefetch (SMEM)
                   x0_ref, hsel_ref, mask_ref,                  # constants
                   ln1g_ref, ln1b_ref, wqkv_ref, bqkv_ref,      # per-layer (streamed)
                   wo_ref, bo_ref, ln2g_ref, ln2b_ref,
                   wfc_ref, bfc_ref, wpr_ref, bpr_ref,
                   lnfg_ref, lnfb_ref, proj_ref,                # final constants
                   o_ref,                                       # output
                   acc_ref):                                    # resident activations
    """Whole CLIP text transformer; grid axis = layer index."""
    l = pl.program_id(0)

    # ---- layer 0: load (prompts + positional_embedding) into the resident acc
    @pl.when(l == 0)
    def _():
        acc_ref[...] = x0_ref[...]

    x = acc_ref[...]                                            # (NL, D) f32

    # ---- attention branch: x + out_proj(MHA(LN1(x))), block-causal mask -----
    xn = _layernorm(x, ln1g_ref[0], ln1b_ref[0])
    qkv = jnp.dot(xn, wqkv_ref[0],
                  preferred_element_type=jnp.float32) + bqkv_ref[0]    # (NL, 3D)
    q = qkv[:, 0 * DIM:1 * DIM]
    k = qkv[:, 1 * DIM:2 * DIM]
    v = qkv[:, 2 * DIM:3 * DIM]

    hsel = hsel_ref[...]                                        # (H*NL, D) 0/1 head mask
    scale = 1.0 / (HEAD_DIM ** 0.5)
    # Stack heads along sublanes: row (h*NL + i) holds q[i] masked to head h.
    qb = jnp.concatenate([q * scale] * HEADS, axis=0) * hsel    # (H*NL, D)
    # One matmul gives all per-head score matrices stacked on sublanes.
    s = jax.lax.dot_general(qb, k, (((1,), (1,)), ((), ())),
                            preferred_element_type=jnp.float32)  # (H*NL, NL)
    s = s + mask_ref[...]                                       # causal + same-prompt
    s = s - jnp.max(s, axis=-1, keepdims=True)
    p = jnp.exp(s)
    p = p * (1.0 / jnp.sum(p, axis=-1, keepdims=True))
    # One PV matmul for all heads; keep only each head's own columns, then
    # collapse the H sublane blocks back to (NL, D).
    of = jnp.dot(p, v, preferred_element_type=jnp.float32) * hsel      # (H*NL, D)
    attn = of[0:NL]
    for h in range(1, HEADS):
        attn = attn + of[h * NL:(h + 1) * NL]
    x = x + jnp.dot(attn, wo_ref[0],
                    preferred_element_type=jnp.float32) + bo_ref[0]

    # ---- MLP branch: x + c_proj(QuickGELU(c_fc(LN2(x)))) --------------------
    xn2 = _layernorm(x, ln2g_ref[0], ln2b_ref[0])
    h1 = jnp.dot(xn2, wfc_ref[0],
                 preferred_element_type=jnp.float32) + bfc_ref[0]
    h1 = h1 * jax.nn.sigmoid(1.702 * h1)                        # QuickGELU
    x = x + jnp.dot(h1, wpr_ref[0],
                    preferred_element_type=jnp.float32) + bpr_ref[0]
    acc_ref[...] = x

    # ---- last layer: EOT gather + ln_final (fp32) + text projection ---------
    @pl.when(l == pl.num_programs(0) - 1)
    def _():
        rows = [acc_ref[pl.ds(n * SEQ + eot_ref[n], 1), :]      # dynamic sublane gather
                for n in range(N_PROMPTS)]
        xe = jnp.concatenate(rows, axis=0)                      # (N, D)
        xnf = _layernorm(xe, lnfg_ref[...], lnfb_ref[...])
        o_ref[...] = jnp.dot(xnf, proj_ref[...],
                             preferred_element_type=jnp.float32)  # (N, PROJ_PAD)


# ============================== wrapper ======================================
@jax.jit
def text_encoder(prompts, tokenized_prompts, params):
    N, L, D = prompts.shape
    assert (N, L, D) == (N_PROMPTS, SEQ, DIM)

    # positional add fused into plain XLA (tiny elementwise), batch folded to
    # the sublane axis.
    x0 = (prompts + params["pos"][None]).reshape(NL, DIM).astype(jnp.float32)

    # TODO(synk): the EOT argmax itself stays as plain-JAX glue; only its
    # result (per-prompt index) is fed to the kernel via scalar prefetch.
    eot = jnp.argmax(tokenized_prompts, axis=-1).astype(jnp.int32)       # (N,)

    # constant masks (shape-only; constant-folded under jit)
    r = jnp.arange(NL)
    same_prompt = (r[:, None] // SEQ) == (r[None, :] // SEQ)
    causal = r[None, :] <= r[:, None]
    base_mask = jnp.where(same_prompt & causal, 0.0, NEG_INF).astype(jnp.float32)
    mask_stacked = jnp.tile(base_mask, (HEADS, 1))                       # (H*NL, NL)

    head_of_row = jnp.arange(HEADS * NL) // NL                           # (H*NL,)
    head_of_col = jnp.arange(DIM) // HEAD_DIM                            # (D,)
    head_sel = (head_of_row[:, None] == head_of_col[None, :]).astype(jnp.float32)

    # lane-dense (128-wide) projection; slice back after the kernel
    proj_pad = jnp.zeros((DIM, PROJ_PAD), jnp.float32)
    proj_pad = proj_pad.at[:, :PROJ_DIM].set(params["proj"])

    const = lambda shape: pl.BlockSpec(shape, lambda l, eot: (0,) * len(shape))
    layer3 = lambda d0, d1: pl.BlockSpec((1, d0, d1), lambda l, eot: (l, 0, 0))

    grid_spec = pltpu.PrefetchScalarGridSpec(
        num_scalar_prefetch=1,
        grid=(LAYERS,),
        in_specs=[
            const((NL, DIM)),                      # x0
            const((HEADS * NL, DIM)),              # head_sel
            const((HEADS * NL, NL)),               # mask
            layer3(1, DIM), layer3(1, DIM),        # ln1 g, b
            layer3(DIM, 3 * DIM), layer3(1, 3 * DIM),   # qkv W, b
            layer3(DIM, DIM), layer3(1, DIM),      # out_proj W, b
            layer3(1, DIM), layer3(1, DIM),        # ln2 g, b
            layer3(DIM, 4 * DIM), layer3(1, 4 * DIM),   # c_fc W, b
            layer3(4 * DIM, DIM), layer3(1, DIM),  # c_proj W, b
            const((1, DIM)), const((1, DIM)),      # ln_final g, b
            const((DIM, PROJ_PAD)),                # text_projection (padded)
        ],
        out_specs=pl.BlockSpec((N_PROMPTS, PROJ_PAD), lambda l, eot: (0, 0)),
        scratch_shapes=[pltpu.VMEM((NL, DIM), jnp.float32)],
    )

    out = pl.pallas_call(
        encoder_kernel,
        out_shape=jax.ShapeDtypeStruct((N_PROMPTS, PROJ_PAD), jnp.float32),
        grid_spec=grid_spec,
        compiler_params=pltpu.CompilerParams(
            dimension_semantics=("arbitrary",)),
    )(eot, x0, head_sel, mask_stacked,
      params["ln1_g"], params["ln1_b"], params["wqkv"], params["bqkv"],
      params["wo"], params["bo"], params["ln2_g"], params["ln2_b"],
      params["wfc"], params["bfc"], params["wpr"], params["bpr"],
      params["lnf_g"], params["lnf_b"], proj_pad)

    return out[:, :PROJ_DIM]


# =========================== params / reference ==============================
def init_params(key):
    ks = jax.random.split(key, 12)
    nrm = lambda kk, shape, s: (s * jax.random.normal(kk, shape)).astype(jnp.float32)
    return {
        "pos": nrm(ks[0], (SEQ, DIM), 0.01),
        "ln1_g": jnp.ones((LAYERS, 1, DIM), jnp.float32),
        "ln1_b": nrm(ks[1], (LAYERS, 1, DIM), 0.01),
        # weights stored pre-transposed to (in, out) for `x @ W`
        "wqkv": nrm(ks[2], (LAYERS, DIM, 3 * DIM), 0.02),
        "bqkv": nrm(ks[3], (LAYERS, 1, 3 * DIM), 0.01),
        "wo": nrm(ks[4], (LAYERS, DIM, DIM), 0.02),
        "bo": nrm(ks[5], (LAYERS, 1, DIM), 0.01),
        "ln2_g": jnp.ones((LAYERS, 1, DIM), jnp.float32),
        "ln2_b": nrm(ks[6], (LAYERS, 1, DIM), 0.01),
        "wfc": nrm(ks[7], (LAYERS, DIM, 4 * DIM), 0.02),
        "bfc": nrm(ks[8], (LAYERS, 1, 4 * DIM), 0.01),
        "wpr": nrm(ks[9], (LAYERS, 4 * DIM, DIM), 0.02),
        "bpr": nrm(ks[10], (LAYERS, 1, DIM), 0.01),
        "lnf_g": jnp.ones((1, DIM), jnp.float32),
        "lnf_b": jnp.zeros((1, DIM), jnp.float32),
        "proj": nrm(ks[11], (DIM, PROJ_DIM), DIM ** -0.5),
    }


def ref_forward(prompts, tok, P):
    """Pure-JAX reference mirroring the PyTorch TextEncoder semantics."""
    x = prompts + P["pos"][None]
    N, L, D = x.shape
    scale = 1.0 / (HEAD_DIM ** 0.5)
    mask = jnp.where(jnp.arange(L)[None, :] > jnp.arange(L)[:, None],
                     NEG_INF, 0.0).astype(jnp.float32)
    for l in range(LAYERS):
        xn = _layernorm(x, P["ln1_g"][l], P["ln1_b"][l])
        qkv = xn @ P["wqkv"][l] + P["bqkv"][l]
        q, k, v = jnp.split(qkv, 3, axis=-1)
        q = (q * scale).reshape(N, L, HEADS, HEAD_DIM)
        k = k.reshape(N, L, HEADS, HEAD_DIM)
        v = v.reshape(N, L, HEADS, HEAD_DIM)
        s = jnp.einsum("nqhd,nkhd->nhqk", q, k) + mask
        p = jax.nn.softmax(s, axis=-1)
        o = jnp.einsum("nhqk,nkhd->nqhd", p, v).reshape(N, L, D)
        x = x + o @ P["wo"][l] + P["bo"][l]
        xn2 = _layernorm(x, P["ln2_g"][l], P["ln2_b"][l])
        h1 = xn2 @ P["wfc"][l] + P["bfc"][l]
        h1 = h1 * jax.nn.sigmoid(1.702 * h1)
        x = x + h1 @ P["wpr"][l] + P["bpr"][l]
    x = _layernorm(x, P["lnf_g"], P["lnf_b"])
    eot = jnp.argmax(tok, axis=-1)
    return x[jnp.arange(N), eot] @ P["proj"]


# ================================== main =====================================
if __name__ == "__main__":
    key = jax.random.PRNGKey(0)
    kp, kt, kw = jax.random.split(key, 3)

    prompts = jax.random.normal(kp, (N_PROMPTS, SEQ, DIM), jnp.float32)
    tokenized = jax.random.randint(kt, (N_PROMPTS, SEQ), 1, 400, dtype=jnp.int32)
    # plant a unique EOT token (largest value) at a known position per prompt
    eot_pos = jnp.array([SEQ - 1, SEQ // 2], dtype=jnp.int32)
    tokenized = tokenized.at[jnp.arange(N_PROMPTS), eot_pos].set(49407)

    params = init_params(kw)

    out = text_encoder(prompts, tokenized, params)
    out = jax.block_until_ready(out)

    ref = ref_forward(prompts, tokenized, params)
    assert out.shape == (N_PROMPTS, PROJ_DIM), out.shape
    if not jnp.allclose(out, ref, rtol=2e-4, atol=2e-4):
        raise AssertionError(
            f"mismatch vs reference, max abs err = {jnp.max(jnp.abs(out - ref))}")

    print("KERNEL_OK")
</pallas_src>

<mosaic_0001>
module attributes {stable_mosaic.version = 11 : i64} {
  func.func @encoder_kernel(%arg0: i32, %arg1: memref<2xi32, #tpu.memory_space<smem>>, %arg2: memref<16x32xf32, #tpu.memory_space<vmem>>, %arg3: memref<64x32xf32, #tpu.memory_space<vmem>>, %arg4: memref<64x16xf32, #tpu.memory_space<vmem>>, %arg5: memref<1x1x32xf32, #tpu.memory_space<vmem>>, %arg6: memref<1x1x32xf32, #tpu.memory_space<vmem>>, %arg7: memref<1x32x96xf32, #tpu.memory_space<vmem>>, %arg8: memref<1x1x96xf32, #tpu.memory_space<vmem>>, %arg9: memref<1x32x32xf32, #tpu.memory_space<vmem>>, %arg10: memref<1x1x32xf32, #tpu.memory_space<vmem>>, %arg11: memref<1x1x32xf32, #tpu.memory_space<vmem>>, %arg12: memref<1x1x32xf32, #tpu.memory_space<vmem>>, %arg13: memref<1x32x128xf32, #tpu.memory_space<vmem>>, %arg14: memref<1x1x128xf32, #tpu.memory_space<vmem>>, %arg15: memref<1x128x32xf32, #tpu.memory_space<vmem>>, %arg16: memref<1x1x32xf32, #tpu.memory_space<vmem>>, %arg17: memref<1x32xf32, #tpu.memory_space<vmem>>, %arg18: memref<1x32xf32, #tpu.memory_space<vmem>>, %arg19: memref<32x128xf32, #tpu.memory_space<vmem>>, %arg20: memref<2x128xf32, #tpu.memory_space<vmem>>, %arg21: memref<16x32xf32, #tpu.memory_space<vmem>>) attributes {dimension_semantics = [#tpu.dimension_semantics<arbitrary>], iteration_bounds = array<i64: 2>, scalar_prefetch = 1 : i64, scratch_operands = 1 : i64, tpu.core_type = #tpu.core_type<tc>, window_params = [{pipeline_mode = #tpu.pipeline_mode<synchronous>, transform_indices = @transform_0, window_bounds = array<i64: 16, 32>}, {pipeline_mode = #tpu.pipeline_mode<synchronous>, transform_indices = @transform_1, window_bounds = array<i64: 64, 32>}, {pipeline_mode = #tpu.pipeline_mode<synchronous>, transform_indices = @transform_2, window_bounds = array<i64: 64, 16>}, {transform_indices = @transform_3, window_bounds = array<i64: 1, 1, 32>}, {transform_indices = @transform_4, window_bounds = array<i64: 1, 1, 32>}, {transform_indices = @transform_5, window_bounds = array<i64: 1, 32, 96>}, {transform_indices = @transform_6, window_bounds = array<i64: 1, 1, 96>}, {transform_indices = @transform_7, window_bounds = array<i64: 1, 32, 32>}, {transform_indices = @transform_8, window_bounds = array<i64: 1, 1, 32>}, {transform_indices = @transform_9, window_bounds = array<i64: 1, 1, 32>}, {transform_indices = @transform_10, window_bounds = array<i64: 1, 1, 32>}, {transform_indices = @transform_11, window_bounds = array<i64: 1, 32, 128>}, {transform_indices = @transform_12, window_bounds = array<i64: 1, 1, 128>}, {transform_indices = @transform_13, window_bounds = array<i64: 1, 128, 32>}, {transform_indices = @transform_14, window_bounds = array<i64: 1, 1, 32>}, {pipeline_mode = #tpu.pipeline_mode<synchronous>, transform_indices = @transform_15, window_bounds = array<i64: 1, 32>}, {pipeline_mode = #tpu.pipeline_mode<synchronous>, transform_indices = @transform_16, window_bounds = array<i64: 1, 32>}, {pipeline_mode = #tpu.pipeline_mode<synchronous>, transform_indices = @transform_17, window_bounds = array<i64: 32, 128>}, {pipeline_mode = #tpu.pipeline_mode<synchronous>, transform_indices = @transform_18, window_bounds = array<i64: 2, 128>}]} {
    %c0_i32 = arith.constant 0 : i32
    %0 = arith.cmpi eq, %arg0, %c0_i32 : i32
    %1 = arith.extui %0 : i1 to i32
    %c0_i32_0 = arith.constant 0 : i32
    %2 = arith.cmpi ne, %1, %c0_i32_0 : i32
    scf.if %2 {
      %c0_66 = arith.constant 0 : index
      %c0_67 = arith.constant 0 : index
      %129 = vector.load %arg2[%c0_66, %c0_67] : memref<16x32xf32, #tpu.memory_space<vmem>>, vector<16x32xf32>
      %c0_68 = arith.constant 0 : index
      %c0_69 = arith.constant 0 : index
      %130 = vector.load %arg21[%c0_68, %c0_69] : memref<16x32xf32, #tpu.memory_space<vmem>>, vector<16x32xf32>
      tpu.vector_store %arg21[%c0_68, %c0_69], %129 {strides = array<i32>} : memref<16x32xf32, #tpu.memory_space<vmem>>, vector<16x32xf32>,
    } else {
    }
    %c0 = arith.constant 0 : index
    %c0_1 = arith.constant 0 : index
    %3 = vector.load %arg21[%c0, %c0_1] : memref<16x32xf32, #tpu.memory_space<vmem>>, vector<16x32xf32>
    %c0_2 = arith.constant 0 : index
    %c0_3 = arith.constant 0 : index
    %c0_4 = arith.constant 0 : index
    %4 = vector.load %arg5[%c0_2, %c0_3, %c0_4] : memref<1x1x32xf32, #tpu.memory_space<vmem>>, vector<1x1x32xf32>
    %5 = vector.shape_cast %4 : vector<1x1x32xf32> to vector<1x32xf32>
    %c0_5 = arith.constant 0 : index
    %c0_6 = arith.constant 0 : index
    %c0_7 = arith.constant 0 : index
    %6 = vector.load %arg6[%c0_5, %c0_6, %c0_7] : memref<1x1x32xf32, #tpu.memory_space<vmem>>, vector<1x1x32xf32>
    %7 = vector.shape_cast %6 : vector<1x1x32xf32> to vector<1x32xf32>
    %cst = arith.constant dense<0.000000e+00> : vector<16xf32>
    %8 = vector.multi_reduction <add>, %3, %cst [1] : vector<16x32xf32> to vector<16xf32>
    %9 = vector.shape_cast %8 : vector<16xf32> to vector<16x1xf32>
    %cst_8 = arith.constant 3.200000e+01 : f32
    %10 = vector.broadcast %cst_8 : f32 to vector<16x1xf32>
    %11 = arith.divf %9, %10 : vector<16x1xf32>
    %12 = vector.broadcast %11 : vector<16x1xf32> to vector<16x32xf32>
    %13 = arith.subf %3, %12 : vector<16x32xf32>
    %14 = arith.mulf %13, %13 : vector<16x32xf32>
    %cst_9 = arith.constant dense<0.000000e+00> : vector<16xf32>
    %15 = vector.multi_reduction <add>, %14, %cst_9 [1] : vector<16x32xf32> to vector<16xf32>
    %16 = vector.shape_cast %15 : vector<16xf32> to vector<16x1xf32>
    %cst_10 = arith.constant 3.200000e+01 : f32
    %17 = vector.broadcast %cst_10 : f32 to vector<16x1xf32>
    %18 = arith.divf %16, %17 : vector<16x1xf32>
    %19 = vector.broadcast %11 : vector<16x1xf32> to vector<16x32xf32>
    %20 = arith.subf %3, %19 : vector<16x32xf32>
    %cst_11 = arith.constant 9.99999974E-6 : f32
    %21 = vector.broadcast %cst_11 : f32 to vector<16x1xf32>
    %22 = arith.addf %18, %21 : vector<16x1xf32>
    %23 = math.rsqrt %22 : vector<16x1xf32>
    %24 = vector.broadcast %23 : vector<16x1xf32> to vector<16x32xf32>
    %25 = arith.mulf %20, %24 : vector<16x32xf32>
    %26 = vector.broadcast %5 : vector<1x32xf32> to vector<16x32xf32>
    %27 = arith.mulf %25, %26 : vector<16x32xf32>
    %28 = vector.broadcast %7 : vector<1x32xf32> to vector<16x32xf32>
    %29 = arith.addf %27, %28 : vector<16x32xf32>
    %c0_12 = arith.constant 0 : index
    %c0_13 = arith.constant 0 : index
    %c0_14 = arith.constant 0 : index
    %30 = vector.load %arg7[%c0_12, %c0_13, %c0_14] : memref<1x32x96xf32, #tpu.memory_space<vmem>>, vector<1x32x96xf32>
    %31 = vector.shape_cast %30 : vector<1x32x96xf32> to vector<32x96xf32>
    %cst_15 = arith.constant dense<0.000000e+00> : vector<16x96xf32>
    %32 = tpu.matmul %29, %31, %cst_15 {dimension_numbers = #tpu.dot_dimension_numbers<[1], [0], [0], [1], [0, 0, 1, 1], [], []>} : vector<16x32xf32>, vector<32x96xf32>, vector<16x96xf32> -> vector<16x96xf32>
    %c0_16 = arith.constant 0 : index
    %c0_17 = arith.constant 0 : index
    %c0_18 = arith.constant 0 : index
    %33 = vector.load %arg8[%c0_16, %c0_17, %c0_18] : memref<1x1x96xf32, #tpu.memory_space<vmem>>, vector<1x1x96xf32>
    %34 = vector.shape_cast %33 : vector<1x1x96xf32> to vector<1x96xf32>
    %35 = vector.broadcast %34 : vector<1x96xf32> to vector<16x96xf32>
    %36 = arith.addf %32, %35 : vector<16x96xf32>
    %37 = vector.extract_strided_slice %36 {offsets = [0, 0], sizes = [16, 32], strides = [1, 1]} : vector<16x96xf32> to vector<16x32xf32>
    %38 = vector.extract_strided_slice %36 {offsets = [0, 32], sizes = [16, 32], strides = [1, 1]} : vector<16x96xf32> to vector<16x32xf32>
    %39 = vector.extract_strided_slice %36 {offsets = [0, 64], sizes = [16, 32], strides = [1, 1]} : vector<16x96xf32> to vector<16x32xf32>
    %c0_19 = arith.constant 0 : index
    %c0_20 = arith.constant 0 : index
    %40 = vector.load %arg3[%c0_19, %c0_20] : memref<64x32xf32, #tpu.memory_space<vmem>>, vector<64x32xf32>
    %cst_21 = arith.constant 0.353553385 : f32
    %41 = vector.broadcast %cst_21 : f32 to vector<16x32xf32>
    %42 = arith.mulf %37, %41 : vector<16x32xf32>
    %43 = tpu.concatenate %42, %42, %42, %42 in 0 : vector<16x32xf32>, vector<16x32xf32>, vector<16x32xf32>, vector<16x32xf32> -> vector<64x32xf32>
    %44 = arith.mulf %43, %40 : vector<64x32xf32>
    %cst_22 = arith.constant dense<0.000000e+00> : vector<64x16xf32>
    %45 = tpu.matmul %44, %38, %cst_22 {dimension_numbers = #tpu.dot_dimension_numbers<[1], [1], [0], [0], [0, 0, 1, 0], [], []>} : vector<64x32xf32>, vector<16x32xf32>, vector<64x16xf32> -> vector<64x16xf32>
    %c0_23 = arith.constant 0 : index
    %c0_24 = arith.constant 0 : index
    %46 = vector.load %arg4[%c0_23, %c0_24] : memref<64x16xf32, #tpu.memory_space<vmem>>, vector<64x16xf32>
    %47 = arith.addf %45, %46 : vector<64x16xf32>
    %cst_25 = arith.constant dense<0xFF800000> : vector<64xf32>
    %48 = vector.multi_reduction <maximumf>, %47, %cst_25 [1] : vector<64x16xf32> to vector<64xf32>
    %49 = vector.shape_cast %48 : vector<64xf32> to vector<64x1xf32>
    %50 = vector.broadcast %49 : vector<64x1xf32> to vector<64x16xf32>
    %51 = arith.subf %47, %50 : vector<64x16xf32>
    %52 = math.exp %51 : vector<64x16xf32>
    %cst_26 = arith.constant dense<0.000000e+00> : vector<64xf32>
    %53 = vector.multi_reduction <add>, %52, %cst_26 [1] : vector<64x16xf32> to vector<64xf32>
    %54 = vector.shape_cast %53 : vector<64xf32> to vector<64x1xf32>
    %cst_27 = arith.constant 1.000000e+00 : f32
    %55 = vector.broadcast %cst_27 : f32 to vector<64x1xf32>
    %56 = arith.divf %55, %54 : vector<64x1xf32>
    %57 = vector.broadcast %56 : vector<64x1xf32> to vector<64x16xf32>
    %58 = arith.mulf %52, %57 : vector<64x16xf32>
    %cst_28 = arith.constant dense<0.000000e+00> : vector<64x32xf32>
    %59 = tpu.matmul %58, %39, %cst_28 {dimension_numbers = #tpu.dot_dimension_numbers<[1], [0], [0], [1], [0, 0, 1, 1], [], []>} : vector<64x16xf32>, vector<16x32xf32>, vector<64x32xf32> -> vector<64x32xf32>
    %60 = arith.mulf %59, %40 : vector<64x32xf32>
    %61 = vector.extract_strided_slice %60 {offsets = [0, 0], sizes = [16, 32], strides = [1, 1]} : vector<64x32xf32> to vector<16x32xf32>
    %62 = vector.extract_strided_slice %60 {offsets = [16, 0], sizes = [16, 32], strides = [1, 1]} : vector<64x32xf32> to vector<16x32xf32>
    %63 = arith.addf %61, %62 : vector<16x32xf32>
    %64 = vector.extract_strided_slice %60 {offsets = [32, 0], sizes = [16, 32], strides = [1, 1]} : vector<64x32xf32> to vector<16x32xf32>
    %65 = arith.addf %63, %64 : vector<16x32xf32>
    %66 = vector.extract_strided_slice %60 {offsets = [48, 0], sizes = [16, 32], strides = [1, 1]} : vector<64x32xf32> to vector<16x32xf32>
    %67 = arith.addf %65, %66 : vector<16x32xf32>
    %c0_29 = arith.constant 0 : index
    %c0_30 = arith.constant 0 : index
    %c0_31 = arith.constant 0 : index
    %68 = vector.load %arg9[%c0_29, %c0_30, %c0_31] : memref<1x32x32xf32, #tpu.memory_space<vmem>>, vector<1x32x32xf32>
    %69 = vector.shape_cast %68 : vector<1x32x32xf32> to vector<32x32xf32>
    %cst_32 = arith.constant dense<0.000000e+00> : vector<16x32xf32>
    %70 = tpu.matmul %67, %69, %cst_32 {dimension_numbers = #tpu.dot_dimension_numbers<[1], [0], [0], [1], [0, 0, 1, 1], [], []>} : vector<16x32xf32>, vector<32x32xf32>, vector<16x32xf32> -> vector<16x32xf32>
    %71 = arith.addf %3, %70 : vector<16x32xf32>
    %c0_33 = arith.constant 0 : index
    %c0_34 = arith.constant 0 : index
    %c0_35 = arith.constant 0 : index
    %72 = vector.load %arg10[%c0_33, %c0_34, %c0_35] : memref<1x1x32xf32, #tpu.memory_space<vmem>>, vector<1x1x32xf32>
    %73 = vector.shape_cast %72 : vector<1x1x32xf32> to vector<1x32xf32>
    %74 = vector.broadcast %73 : vector<1x32xf32> to vector<16x32xf32>
    %75 = arith.addf %71, %74 : vector<16x32xf32>
    %c0_36 = arith.constant 0 : index
    %c0_37 = arith.constant 0 : index
    %c0_38 = arith.constant 0 : index
    %76 = vector.load %arg11[%c0_36, %c0_37, %c0_38] : memref<1x1x32xf32, #tpu.memory_space<vmem>>, vector<1x1x32xf32>
    %77 = vector.shape_cast %76 : vector<1x1x32xf32> to vector<1x32xf32>
    %c0_39 = arith.constant 0 : index
    %c0_40 = arith.constant 0 : index
    %c0_41 = arith.constant 0 : index
    %78 = vector.load %arg12[%c0_39, %c0_40, %c0_41] : memref<1x1x32xf32, #tpu.memory_space<vmem>>, vector<1x1x32xf32>
    %79 = vector.shape_cast %78 : vector<1x1x32xf32> to vector<1x32xf32>
    %cst_42 = arith.constant dense<0.000000e+00> : vector<16xf32>
    %80 = vector.multi_reduction <add>, %75, %cst_42 [1] : vector<16x32xf32> to vector<16xf32>
    %81 = vector.shape_cast %80 : vector<16xf32> to vector<16x1xf32>
    %cst_43 = arith.constant 3.200000e+01 : f32
    %82 = vector.broadcast %cst_43 : f32 to vector<16x1xf32>
    %83 = arith.divf %81, %82 : vector<16x1xf32>
    %84 = vector.broadcast %83 : vector<16x1xf32> to vector<16x32xf32>
    %85 = arith.subf %75, %84 : vector<16x32xf32>
    %86 = arith.mulf %85, %85 : vector<16x32xf32>
    %cst_44 = arith.constant dense<0.000000e+00> : vector<16xf32>
    %87 = vector.multi_reduction <add>, %86, %cst_44 [1] : vector<16x32xf32> to vector<16xf32>
    %88 = vector.shape_cast %87 : vector<16xf32> to vector<16x1xf32>
    %cst_45 = arith.constant 3.200000e+01 : f32
    %89 = vector.broadcast %cst_45 : f32 to vector<16x1xf32>
    %90 = arith.divf %88, %89 : vector<16x1xf32>
    %91 = vector.broadcast %83 : vector<16x1xf32> to vector<16x32xf32>
    %92 = arith.subf %75, %91 : vector<16x32xf32>
    %cst_46 = arith.constant 9.99999974E-6 : f32
    %93 = vector.broadcast %cst_46 : f32 to vector<16x1xf32>
    %94 = arith.addf %90, %93 : vector<16x1xf32>
    %95 = math.rsqrt %94 : vector<16x1xf32>
    %96 = vector.broadcast %95 : vector<16x1xf32> to vector<16x32xf32>
    %97 = arith.mulf %92, %96 : vector<16x32xf32>
    %98 = vector.broadcast %77 : vector<1x32xf32> to vector<16x32xf32>
    %99 = arith.mulf %97, %98 : vector<16x32xf32>
    %100 = vector.broadcast %79 : vector<1x32xf32> to vector<16x32xf32>
    %101 = arith.addf %99, %100 : vector<16x32xf32>
    %c0_47 = arith.constant 0 : index
    %c0_48 = arith.constant 0 : index
    %c0_49 = arith.constant 0 : index
    %102 = vector.load %arg13[%c0_47, %c0_48, %c0_49] : memref<1x32x128xf32, #tpu.memory_space<vmem>>, vector<1x32x128xf32>
    %103 = vector.shape_cast %102 : vector<1x32x128xf32> to vector<32x128xf32>
    %cst_50 = arith.constant dense<0.000000e+00> : vector<16x128xf32>
    %104 = tpu.matmul %101, %103, %cst_50 {dimension_numbers = #tpu.dot_dimension_numbers<[1], [0], [0], [1], [0, 0, 1, 1], [], []>} : vector<16x32xf32>, vector<32x128xf32>, vector<16x128xf32> -> vector<16x128xf32>
    %c0_51 = arith.constant 0 : index
    %c0_52 = arith.constant 0 : index
    %c0_53 = arith.constant 0 : index
    %105 = vector.load %arg14[%c0_51, %c0_52, %c0_53] : memref<1x1x128xf32, #tpu.memory_space<vmem>>, vector<1x1x128xf32>
    %106 = vector.shape_cast %105 : vector<1x1x128xf32> to vector<1x128xf32>
    %107 = vector.broadcast %106 : vector<1x128xf32> to vector<16x128xf32>
    %108 = arith.addf %104, %107 : vector<16x128xf32>
    %cst_54 = arith.constant 1.702000e+00 : f32
    %109 = vector.broadcast %cst_54 : f32 to vector<16x128xf32>
    %110 = arith.mulf %109, %108 : vector<16x128xf32>
    %111 = arith.negf %110 : vector<16x128xf32>
    %112 = math.exp %111 : vector<16x128xf32>
    %cst_55 = arith.constant 1.000000e+00 : f32
    %113 = vector.broadcast %cst_55 : f32 to vector<16x128xf32>
    %114 = arith.addf %113, %112 : vector<16x128xf32>
    %115 = arith.divf %113, %114 : vector<16x128xf32>
    %116 = arith.mulf %108, %115 : vector<16x128xf32>
    %c0_56 = arith.constant 0 : index
    %c0_57 = arith.constant 0 : index
    %c0_58 = arith.constant 0 : index
    %117 = vector.load %arg15[%c0_56, %c0_57, %c0_58] : memref<1x128x32xf32, #tpu.memory_space<vmem>>, vector<1x128x32xf32>
    %118 = vector.shape_cast %117 : vector<1x128x32xf32> to vector<128x32xf32>
    %cst_59 = arith.constant dense<0.000000e+00> : vector<16x32xf32>
    %119 = tpu.matmul %116, %118, %cst_59 {dimension_numbers = #tpu.dot_dimension_numbers<[1], [0], [0], [1], [0, 0, 1, 1], [], []>} : vector<16x128xf32>, vector<128x32xf32>, vector<16x32xf32> -> vector<16x32xf32>
    %120 = arith.addf %75, %119 : vector<16x32xf32>
    %c0_60 = arith.constant 0 : index
    %c0_61 = arith.constant 0 : index
    %c0_62 = arith.constant 0 : index
    %121 = vector.load %arg16[%c0_60, %c0_61, %c0_62] : memref<1x1x32xf32, #tpu.memory_space<vmem>>, vector<1x1x32xf32>
    %122 = vector.shape_cast %121 : vector<1x1x32xf32> to vector<1x32xf32>
    %123 = vector.broadcast %122 : vector<1x32xf32> to vector<16x32xf32>
    %124 = arith.addf %120, %123 : vector<16x32xf32>
    %c0_63 = arith.constant 0 : index
    %c0_64 = arith.constant 0 : index
    %125 = vector.load %arg21[%c0_63, %c0_64] : memref<16x32xf32, #tpu.memory_space<vmem>>, vector<16x32xf32>
    tpu.vector_store %arg21[%c0_63, %c0_64], %124 {strides = array<i32>} : memref<16x32xf32, #tpu.memory_space<vmem>>, vector<16x32xf32>,
    %c1_i32 = arith.constant 1 : i32
    %126 = arith.cmpi eq, %arg0, %c1_i32 : i32
    %127 = arith.extui %126 : i1 to i32
    %c0_i32_65 = arith.constant 0 : i32
    %128 = arith.cmpi ne, %127, %c0_i32_65 : i32
    scf.if %128 {
      %c0_66 = arith.constant 0 : index
      %129 = memref.load %arg1[%c0_66] : memref<2xi32, #tpu.memory_space<smem>>
      %c0_i32_67 = arith.constant 0 : i32
      %130 = arith.addi %c0_i32_67, %129 : i32
      %131 = arith.index_cast %130 : i32 to index
      %c0_68 = arith.constant 0 : index
      %132 = vector.load %arg21[%131, %c0_68] : memref<16x32xf32, #tpu.memory_space<vmem>>, vector<1x32xf32>
      %c1 = arith.constant 1 : index
      %133 = memref.load %arg1[%c1] : memref<2xi32, #tpu.memory_space<smem>>
      %c8_i32 = arith.constant 8 : i32
      %134 = arith.addi %c8_i32, %133 : i32
      %135 = arith.index_cast %134 : i32 to index
      %c0_69 = arith.constant 0 : index
      %136 = vector.load %arg21[%135, %c0_69] : memref<16x32xf32, #tpu.memory_space<vmem>>, vector<1x32xf32>
      %137 = tpu.concatenate %132, %136 in 0 : vector<1x32xf32>, vector<1x32xf32> -> vector<2x32xf32>
      %c0_70 = arith.constant 0 : index
      %c0_71 = arith.constant 0 : index
      %138 = vector.load %arg17[%c0_70, %c0_71] : memref<1x32xf32, #tpu.memory_space<vmem>>, vector<1x32xf32>
      %c0_72 = arith.constant 0 : index
      %c0_73 = arith.constant 0 : index
      %139 = vector.load %arg18[%c0_72, %c0_73] : memref<1x32xf32, #tpu.memory_space<vmem>>, vector<1x32xf32>
      %cst_74 = arith.constant dense<0.000000e+00> : vector<2xf32>
      %140 = vector.multi_reduction <add>, %137, %cst_74 [1] : vector<2x32xf32> to vector<2xf32>
      %141 = vector.shape_cast %140 : vector<2xf32> to vector<2x1xf32>
      %cst_75 = arith.constant 3.200000e+01 : f32
      %142 = vector.broadcast %cst_75 : f32 to vector<2x1xf32>
      %143 = arith.divf %141, %142 : vector<2x1xf32>
      %144 = vector.broadcast %143 : vector<2x1xf32> to vector<2x32xf32>
      %145 = arith.subf %137, %144 : vector<2x32xf32>
      %146 = arith.mulf %145, %145 : vector<2x32xf32>
      %cst_76 = arith.constant dense<0.000000e+00> : vector<2xf32>
      %147 = vector.multi_reduction <add>, %146, %cst_76 [1] : vector<2x32xf32> to vector<2xf32>
      %148 = vector.shape_cast %147 : vector<2xf32> to vector<2x1xf32>
      %cst_77 = arith.constant 3.200000e+01 : f32
      %149 = vector.broadcast %cst_77 : f32 to vector<2x1xf32>
      %150 = arith.divf %148, %149 : vector<2x1xf32>
      %151 = vector.broadcast %143 : vector<2x1xf32> to vector<2x32xf32>
      %152 = arith.subf %137, %151 : vector<2x32xf32>
      %cst_78 = arith.constant 9.99999974E-6 : f32
      %153 = vector.broadcast %cst_78 : f32 to vector<2x1xf32>
      %154 = arith.addf %150, %153 : vector<2x1xf32>
      %155 = math.rsqrt %154 : vector<2x1xf32>
      %156 = vector.broadcast %155 : vector<2x1xf32> to vector<2x32xf32>
      %157 = arith.mulf %152, %156 : vector<2x32xf32>
      %158 = vector.broadcast %138 : vector<1x32xf32> to vector<2x32xf32>
      %159 = arith.mulf %157, %158 : vector<2x32xf32>
      %160 = vector.broadcast %139 : vector<1x32xf32> to vector<2x32xf32>
      %161 = arith.addf %159, %160 : vector<2x32xf32>
      %c0_79 = arith.constant 0 : index
      %c0_80 = arith.constant 0 : index
      %162 = vector.load %arg19[%c0_79, %c0_80] : memref<32x128xf32, #tpu.memory_space<vmem>>, vector<32x128xf32>
      %cst_81 = arith.constant dense<0.000000e+00> : vector<2x128xf32>
      %163 = tpu.matmul %161, %162, %cst_81 {dimension_numbers = #tpu.dot_dimension_numbers<[1], [0], [0], [1], [0, 0, 1, 1], [], []>} : vector<2x32xf32>, vector<32x128xf32>, vector<2x128xf32> -> vector<2x128xf32>
      %c0_82 = arith.constant 0 : index
      %c0_83 = arith.constant 0 : index
      %164 = vector.load %arg20[%c0_82, %c0_83] : memref<2x128xf32, #tpu.memory_space<vmem>>, vector<2x128xf32>
      tpu.vector_store %arg20[%c0_82, %c0_83], %163 {strides = array<i32>} : memref<2x128xf32, #tpu.memory_space<vmem>>, vector<2x128xf32>,
    } else {
    }
    return
  }
  func.func @transform_0(%arg0: i32, %arg1: memref<2xi32, #tpu.memory_space<smem>>) -> (i32, i32) {
    %c0_i32 = arith.constant 0 : i32
    %c0_i32_0 = arith.constant 0 : i32
    %c0_i32_1 = arith.constant 0 : i32
    return %c0_i32, %c0_i32_0 : i32, i32
  }
  func.func @transform_1(%arg0: i32, %arg1: memref<2xi32, #tpu.memory_space<smem>>) -> (i32, i32) {
    %c0_i32 = arith.constant 0 : i32
    %c0_i32_0 = arith.constant 0 : i32
    %c0_i32_1 = arith.constant 0 : i32
    return %c0_i32, %c0_i32_0 : i32, i32
  }
  func.func @transform_2(%arg0: i32, %arg1: memref<2xi32, #tpu.memory_space<smem>>) -> (i32, i32) {
    %c0_i32 = arith.constant 0 : i32
    %c0_i32_0 = arith.constant 0 : i32
    %c0_i32_1 = arith.constant 0 : i32
    return %c0_i32, %c0_i32_0 : i32, i32
  }
  func.func @transform_3(%arg0: i32, %arg1: memref<2xi32, #tpu.memory_space<smem>>) -> (i32, i32, i32) {
    %c0_i32 = arith.constant 0 : i32
    %c0_i32_0 = arith.constant 0 : i32
    %c0_i32_1 = arith.constant 0 : i32
    return %arg0, %c0_i32, %c0_i32_0 : i32, i32, i32
  }
  func.func @transform_4(%arg0: i32, %arg1: memref<2xi32, #tpu.memory_space<smem>>) -> (i32, i32, i32) {
    %c0_i32 = arith.constant 0 : i32
    %c0_i32_0 = arith.constant 0 : i32
    %c0_i32_1 = arith.constant 0 : i32
    return %arg0, %c0_i32, %c0_i32_0 : i32, i32, i32
  }
  func.func @transform_5(%arg0: i32, %arg1: memref<2xi32, #tpu.memory_space<smem>>) -> (i32, i32, i32) {
    %c0_i32 = arith.constant 0 : i32
    %c0_i32_0 = arith.constant 0 : i32
    %c0_i32_1 = arith.constant 0 : i32
    return %arg0, %c0_i32, %c0_i32_0 : i32, i32, i32
  }
  func.func @transform_6(%arg0: i32, %arg1: memref<2xi32, #tpu.memory_space<smem>>) -> (i32, i32, i32) {
    %c0_i32 = arith.constant 0 : i32
    %c0_i32_0 = arith.constant 0 : i32
    %c0_i32_1 = arith.constant 0 : i32
    return %arg0, %c0_i32, %c0_i32_0 : i32, i32, i32
  }
  func.func @transform_7(%arg0: i32, %arg1: memref<2xi32, #tpu.memory_space<smem>>) -> (i32, i32, i32) {
    %c0_i32 = arith.constant 0 : i32
    %c0_i32_0 = arith.constant 0 : i32
    %c0_i32_1 = arith.constant 0 : i32
    return %arg0, %c0_i32, %c0_i32_0 : i32, i32, i32
  }
  func.func @transform_8(%arg0: i32, %arg1: memref<2xi32, #tpu.memory_space<smem>>) -> (i32, i32, i32) {
    %c0_i32 = arith.constant 0 : i32
    %c0_i32_0 = arith.constant 0 : i32
    %c0_i32_1 = arith.constant 0 : i32
    return %arg0, %c0_i32, %c0_i32_0 : i32, i32, i32
  }
  func.func @transform_9(%arg0: i32, %arg1: memref<2xi32, #tpu.memory_space<smem>>) -> (i32, i32, i32) {
    %c0_i32 = arith.constant 0 : i32
    %c0_i32_0 = arith.constant 0 : i32
    %c0_i32_1 = arith.constant 0 : i32
    return %arg0, %c0_i32, %c0_i32_0 : i32, i32, i32
  }
  func.func @transform_10(%arg0: i32, %arg1: memref<2xi32, #tpu.memory_space<smem>>) -> (i32, i32, i32) {
    %c0_i32 = arith.constant 0 : i32
    %c0_i32_0 = arith.constant 0 : i32
    %c0_i32_1 = arith.constant 0 : i32
    return %arg0, %c0_i32, %c0_i32_0 : i32, i32, i32
  }
  func.func @transform_11(%arg0: i32, %arg1: memref<2xi32, #tpu.memory_space<smem>>) -> (i32, i32, i32) {
    %c0_i32 = arith.constant 0 : i32
    %c0_i32_0 = arith.constant 0 : i32
    %c0_i32_1 = arith.constant 0 : i32
    return %arg0, %c0_i32, %c0_i32_0 : i32, i32, i32
  }
  func.func @transform_12(%arg0: i32, %arg1: memref<2xi32, #tpu.memory_space<smem>>) -> (i32, i32, i32) {
    %c0_i32 = arith.constant 0 : i32
    %c0_i32_0 = arith.constant 0 : i32
    %c0_i32_1 = arith.constant 0 : i32
    return %arg0, %c0_i32, %c0_i32_0 : i32, i32, i32
  }
  func.func @transform_13(%arg0: i32, %arg1: memref<2xi32, #tpu.memory_space<smem>>) -> (i32, i32, i32) {
    %c0_i32 = arith.constant 0 : i32
    %c0_i32_0 = arith.constant 0 : i32
    %c0_i32_1 = arith.constant 0 : i32
    return %arg0, %c0_i32, %c0_i32_0 : i32, i32, i32
  }
  func.func @transform_14(%arg0: i32, %arg1: memref<2xi32, #tpu.memory_space<smem>>) -> (i32, i32, i32) {
    %c0_i32 = arith.constant 0 : i32
    %c0_i32_0 = arith.constant 0 : i32
    %c0_i32_1 = arith.constant 0 : i32
    return %arg0, %c0_i32, %c0_i32_0 : i32, i32, i32
  }
  func.func @transform_15(%arg0: i32, %arg1: memref<2xi32, #tpu.memory_space<smem>>) -> (i32, i32) {
    %c0_i32 = arith.constant 0 : i32
    %c0_i32_0 = arith.constant 0 : i32
    %c0_i32_1 = arith.constant 0 : i32
    return %c0_i32, %c0_i32_0 : i32, i32
  }
  func.func @transform_16(%arg0: i32, %arg1: memref<2xi32, #tpu.memory_space<smem>>) -> (i32, i32) {
    %c0_i32 = arith.constant 0 : i32
    %c0_i32_0 = arith.constant 0 : i32
    %c0_i32_1 = arith.constant 0 : i32
    return %c0_i32, %c0_i32_0 : i32, i32
  }
  func.func @transform_17(%arg0: i32, %arg1: memref<2xi32, #tpu.memory_space<smem>>) -> (i32, i32) {
    %c0_i32 = arith.constant 0 : i32
    %c0_i32_0 = arith.constant 0 : i32
    %c0_i32_1 = arith.constant 0 : i32
    return %c0_i32, %c0_i32_0 : i32, i32
  }
  func.func @transform_18(%arg0: i32, %arg1: memref<2xi32, #tpu.memory_space<smem>>) -> (i32, i32) {
    %c0_i32 = arith.constant 0 : i32
    %c0_i32_0 = arith.constant 0 : i32
    %c0_i32_1 = arith.constant 0 : i32
    return %c0_i32, %c0_i32_0 : i32, i32
  }
}

</mosaic_0001>

<llo_original>
// kernel: text_encoder.1
$region0: #{text_encoder.1}
  #allocation0 [shape = 'u32[]', space=smem, size = 0x4, offset = 0x4, fixed_abs, tag = 'smem constant byte address 0x4 - core index']
  #allocation1 [shape = 'u32[144,128]{1,0:T(1,128)}', space=vmem, size = 0x12000, scoped, tag = 'internal scratch']
  #allocation2 [shape = 'f32[16,32]{1,0:T(8,128)}', space=vmem, size = 0x2000, scoped, tag = 'scratch operand']
  #allocation3 [shape = 's32[1]{0}', space=sflag, size = 0x4, scoped, tag = 'scoped memory for text_encoder.1']
  #allocation4 [shape = 'u8[512]{0}', space=smem, size = 0x200, scoped, tag = 'prefetched SMEM operand 0']
  %s0 = inlined_call_operand.vmem [shape: s32[2], index: 0, kind: input, shape index: {}]
  %s1 = inlined_call_operand.vmem [shape: f32[16,32], index: 1, kind: input, shape index: {}]
  %s2 = inlined_call_operand.vmem [shape: f32[64,32], index: 2, kind: input, shape index: {}]
  %s3 = inlined_call_operand.vmem [shape: f32[64,16], index: 3, kind: input, shape index: {}]
  %s4 = inlined_call_operand.vmem [shape: f32[2,1,32], index: 4, kind: input, shape index: {}]
  %s5 = inlined_call_operand.vmem [shape: f32[2,1,32], index: 5, kind: input, shape index: {}]
  %s6 = inlined_call_operand.vmem [shape: f32[2,32,96], index: 6, kind: input, shape index: {}]
  %s7 = inlined_call_operand.vmem [shape: f32[2,1,96], index: 7, kind: input, shape index: {}]
  %s8 = inlined_call_operand.vmem [shape: f32[2,32,32], index: 8, kind: input, shape index: {}]
  %s9 = inlined_call_operand.vmem [shape: f32[2,1,32], index: 9, kind: input, shape index: {}]
  %s10 = inlined_call_operand.vmem [shape: f32[2,1,32], index: 10, kind: input, shape index: {}]
  %s11 = inlined_call_operand.vmem [shape: f32[2,1,32], index: 11, kind: input, shape index: {}]
  %s12 = inlined_call_operand.vmem [shape: f32[2,32,128], index: 12, kind: input, shape index: {}]
  %s13 = inlined_call_operand.vmem [shape: f32[2,1,128], index: 13, kind: input, shape index: {}]
  %s14 = inlined_call_operand.vmem [shape: f32[2,128,32], index: 14, kind: input, shape index: {}]
  %s15 = inlined_call_operand.vmem [shape: f32[2,1,32], index: 15, kind: input, shape index: {}]
  %s16 = inlined_call_operand.vmem [shape: f32[1,32], index: 16, kind: input, shape index: {}]
  %s17 = inlined_call_operand.vmem [shape: f32[1,32], index: 17, kind: input, shape index: {}]
  %s18 = inlined_call_operand.vmem [shape: f32[32,128], index: 18, kind: input, shape index: {}]
  %s19 = inlined_call_operand.hbm [shape: f32[2,128], index: 19, kind: output, shape index: {}]
  %s20 = sld [smem:[#allocation0]]
  $region113: #{text_encoder.1} parent=0
    _
  %s22 = ssub.s32 1, %s20
  %s23 = scalar_select 0, %s22, %s20
  %s24 = sshll.u32 %s0, 4
  %s25 = int_to_ptr.vmem [resolvable:$true] %s24
  %27 = dma.vmem_to_smem %s25, 16, [#allocation4], [#allocation3]
  %28 = dma.done [#allocation3], 16
  %29 = sfence
  $region1: #{text_encoder.1} parent=0
    #allocation5 [shape = 'u8[1024]{0}', space=vmem, size = 0x400, scoped, tag = 'output window, operand 0, single buffered']
    #allocation6 [shape = 's32[2]{0}', space=sflag, size = 0x8, scoped, tag = 'scoped memory for text_encoder.1']
    %30 = vsyncpa [#allocation6], 0
    loop: start=0, step=1, limit=4
    $region2: #{text_encoder.1} parent=1 // loop_pre_header
      _
    $region3: #{text_encoder.1} parent=1 // loop_header
      %s32 = sphi 0, %s36
      %p33 = scmp.ge.s32.totalorder %s32, 4
      %s40 = sphi 0, %s40
      %s42 = sphi 0, %s40
      %s43 = sphi 0, %s42
      %s57 = sphi 0, %s43
      %s61 = sphi 0, %s61
      %s63 = sphi 0, %s61
      %s64 = sphi 0, %s63
      %s78 = sphi 0, %s64
      %s82 = sphi 0, %s82
      %s84 = sphi 0, %s82
      %s85 = sphi 0, %s84
      %s99 = sphi 0, %s85
      %s105 = sphi 0, %s107
      %s108 = sphi 0, %s105
      %s109 = sphi 0, %s108
      %s125 = sphi 0, %s109
      %s131 = sphi 0, %s133
      %s134 = sphi 0, %s131
      %s135 = sphi 0, %s134
      %s151 = sphi 0, %s135
      %s157 = sphi 0, %s159
      %s160 = sphi 0, %s157
      %s161 = sphi 0, %s160
      %s177 = sphi 0, %s161
      %s183 = sphi 0, %s185
      %s186 = sphi 0, %s183
      %s187 = sphi 0, %s186
      %s203 = sphi 0, %s187
      %s209 = sphi 0, %s211
      %s212 = sphi 0, %s209
      %s213 = sphi 0, %s212
      %s229 = sphi 0, %s213
      %s235 = sphi 0, %s237
      %s238 = sphi 0, %s235
      %s239 = sphi 0, %s238
      %s255 = sphi 0, %s239
      %s261 = sphi 0, %s263
      %s264 = sphi 0, %s261
      %s265 = sphi 0, %s264
      %s281 = sphi 0, %s265
      %s287 = sphi 0, %s289
      %s290 = sphi 0, %s287
      %s291 = sphi 0, %s290
      %s307 = sphi 0, %s291
      %s313 = sphi 0, %s315
      %s316 = sphi 0, %s313
      %s317 = sphi 0, %s316
      %s333 = sphi 0, %s317
      %s339 = sphi 0, %s341
      %s342 = sphi 0, %s339
      %s343 = sphi 0, %s342
      %s359 = sphi 0, %s343
      %s365 = sphi 0, %s367
      %s368 = sphi 0, %s365
      %s369 = sphi 0, %s368
      %s385 = sphi 0, %s369
      %s391 = sphi 0, %s393
      %s394 = sphi 0, %s391
      %s395 = sphi 0, %s394
      %s411 = sphi 0, %s395
      %s415 = sphi 0, %s415
      %s417 = sphi 0, %s415
      %s418 = sphi 0, %s417
      %s432 = sphi 0, %s418
      %s436 = sphi 0, %s436
      %s438 = sphi 0, %s436
      %s439 = sphi 0, %s438
      %s453 = sphi 0, %s439
      %s457 = sphi 0, %s457
      %s459 = sphi 0, %s457
      %s460 = sphi 0, %s459
      %s474 = sphi 0, %s460
      %s478 = sphi 0, %s478
      %s480 = sphi 0, %s478
      %s481 = sphi 0, %s480
      %s495 = sphi 0, %s481
    $region4: #{text_encoder.1} parent=1 // loop_header_branch
      %35 = sbr.rel (%p33) target = $region8
    $region5: #{text_encoder.1} parent=1 // loop_body
      %s37 = ssub.s32 %s32, 1
      %s38 = ssub.s32 %s32, 2
      %s39 = sadd.s32 %s32, 1
      %s41 = sadd.s32 %s40, 1
      %p44 = scmp.eq.s32.totalorder %s32, 1
      %p45 = scmp.ne.s32.totalorder %s40, %s42
      %p46 = scmp.eq.s32.totalorder %s32, 0
      %p47 = por %p45, %p46
      %p48 = scmp.ne.s32.totalorder %s40, %s42
      %p49 = scmp.eq.s32.totalorder %s37, 1
      %p50 = por %p48, %p49
      %p51 = scmp.ne.s32.totalorder %s42, %s43
      %p52 = scmp.eq.s32.totalorder %s37, 0
      %p53 = por %p51, %p52
      %p54 = scmp.ne.s32.totalorder %s42, %s43
      %p55 = scmp.eq.s32.totalorder %s38, 1
      %p56 = por %p54, %p55
      %p58 = scmp.ne.s32.totalorder %s43, %s57
      %p59 = scmp.eq.s32.totalorder %s38, 0
      %p60 = por %p58, %p59
      %s62 = sadd.s32 %s61, 1
      %p65 = scmp.eq.s32.totalorder %s32, 1
      %p66 = scmp.ne.s32.totalorder %s61, %s63
      %p67 = scmp.eq.s32.totalorder %s32, 0
      %p68 = por %p66, %p67
      %p69 = scmp.ne.s32.totalorder %s61, %s63
      %p70 = scmp.eq.s32.totalorder %s37, 1
      %p71 = por %p69, %p70
      %p72 = scmp.ne.s32.totalorder %s63, %s64
      %p73 = scmp.eq.s32.totalorder %s37, 0
      %p74 = por %p72, %p73
      %p75 = scmp.ne.s32.totalorder %s63, %s64
      %p76 = scmp.eq.s32.totalorder %s38, 1
      %p77 = por %p75, %p76
      %p79 = scmp.ne.s32.totalorder %s64, %s78
      %p80 = scmp.eq.s32.totalorder %s38, 0
      %p81 = por %p79, %p80
      %s83 = sadd.s32 %s82, 1
      %p86 = scmp.eq.s32.totalorder %s32, 1
      %p87 = scmp.ne.s32.totalorder %s82, %s84
      %p88 = scmp.eq.s32.totalorder %s32, 0
      %p89 = por %p87, %p88
      %p90 = scmp.ne.s32.totalorder %s82, %s84
      %p91 = scmp.eq.s32.totalorder %s37, 1
      %p92 = por %p90, %p91
      %p93 = scmp.ne.s32.totalorder %s84, %s85
      %p94 = scmp.eq.s32.totalorder %s37, 0
      %p95 = por %p93, %p94
      %p96 = scmp.ne.s32.totalorder %s84, %s85
      %p97 = scmp.eq.s32.totalorder %s38, 1
      %p98 = por %p96, %p97
      %p100 = scmp.ne.s32.totalorder %s85, %s99
      %p101 = scmp.eq.s32.totalorder %s38, 0
      %p102 = por %p100, %p101
      %s103 = ssub.s32 %s32, %s39
      %p104 = scmp.eq.s32.totalorder %s103, 0
      %s106 = sadd.s32 %s105, 1
      %s107 = scalar_select %p104, %s105, %s106
      %p110 = pneg %p104
      %p111 = scmp.eq.s32.totalorder %s32, 1
      %p112 = por %p110, %p111
      %p113 = scmp.ne.s32.totalorder %s105, %s108
      %p114 = scmp.eq.s32.totalorder %s32, 0
      %p115 = por %p113, %p114
      %p116 = scmp.ne.s32.totalorder %s105, %s108
      %p117 = scmp.eq.s32.totalorder %s37, 1
      %p118 = por %p116, %p117
      %p119 = scmp.ne.s32.totalorder %s108, %s109
      %p120 = scmp.eq.s32.totalorder %s37, 0
      %p121 = por %p119, %p120
      %p122 = scmp.ne.s32.totalorder %s108, %s109
      %p123 = scmp.eq.s32.totalorder %s38, 1
      %p124 = por %p122, %p123
      %p126 = scmp.ne.s32.totalorder %s109, %s125
      %p127 = scmp.eq.s32.totalorder %s38, 0
      %p128 = por %p126, %p127
      %s129 = ssub.s32 %s32, %s39
      %p130 = scmp.eq.s32.totalorder %s129, 0
      %s132 = sadd.s32 %s131, 1
      %s133 = scalar_select %p130, %s131, %s132
      %p136 = pneg %p130
      %p137 = scmp.eq.s32.totalorder %s32, 1
      %p138 = por %p136, %p137
      %p139 = scmp.ne.s32.totalorder %s131, %s134
      %p140 = scmp.eq.s32.totalorder %s32, 0
      %p141 = por %p139, %p140
      %p142 = scmp.ne.s32.totalorder %s131, %s134
      %p143 = scmp.eq.s32.totalorder %s37, 1
      %p144 = por %p142, %p143
      %p145 = scmp.ne.s32.totalorder %s134, %s135
      %p146 = scmp.eq.s32.totalorder %s37, 0
      %p147 = por %p145, %p146
      %p148 = scmp.ne.s32.totalorder %s134, %s135
      %p149 = scmp.eq.s32.totalorder %s38, 1
      %p150 = por %p148, %p149
      %p152 = scmp.ne.s32.totalorder %s135, %s151
      %p153 = scmp.eq.s32.totalorder %s38, 0
      %p154 = por %p152, %p153
      %s155 = ssub.s32 %s32, %s39
      %p156 = scmp.eq.s32.totalorder %s155, 0
      %s158 = sadd.s32 %s157, 1
      %s159 = scalar_select %p156, %s157, %s158
      %p162 = pneg %p156
      %p163 = scmp.eq.s32.totalorder %s32, 1
      %p164 = por %p162, %p163
      %p165 = scmp.ne.s32.totalorder %s157, %s160
      %p166 = scmp.eq.s32.totalorder %s32, 0
      %p167 = por %p165, %p166
      %p168 = scmp.ne.s32.totalorder %s157, %s160
      %p169 = scmp.eq.s32.totalorder %s37, 1
      %p170 = por %p168, %p169
      %p171 = scmp.ne.s32.totalorder %s160, %s161
      %p172 = scmp.eq.s32.totalorder %s37, 0
      %p173 = por %p171, %p172
      %p174 = scmp.ne.s32.totalorder %s160, %s161
      %p175 = scmp.eq.s32.totalorder %s38, 1
      %p176 = por %p174, %p175
      %p178 = scmp.ne.s32.totalorder %s161, %s177
      %p179 = scmp.eq.s32.totalorder %s38, 0
      %p180 = por %p178, %p179
      %s181 = ssub.s32 %s32, %s39
      %p182 = scmp.eq.s32.totalorder %s181, 0
      %s184 = sadd.s32 %s183, 1
      %s185 = scalar_select %p182, %s183, %s184
      %p188 = pneg %p182
      %p189 = scmp.eq.s32.totalorder %s32, 1
      %p190 = por %p188, %p189
      %p191 = scmp.ne.s32.totalorder %s183, %s186
      %p192 = scmp.eq.s32.totalorder %s32, 0
      %p193 = por %p191, %p192
      %p194 = scmp.ne.s32.totalorder %s183, %s186
      %p195 = scmp.eq.s32.totalorder %s37, 1
      %p196 = por %p194, %p195
      %p197 = scmp.ne.s32.totalorder %s186, %s187
      %p198 = scmp.eq.s32.totalorder %s37, 0
      %p199 = por %p197, %p198
      %p200 = scmp.ne.s32.totalorder %s186, %s187
      %p201 = scmp.eq.s32.totalorder %s38, 1
      %p202 = por %p200, %p201
      %p204 = scmp.ne.s32.totalorder %s187, %s203
      %p205 = scmp.eq.s32.totalorder %s38, 0
      %p206 = por %p204, %p205
      %s207 = ssub.s32 %s32, %s39
      %p208 = scmp.eq.s32.totalorder %s207, 0
      %s210 = sadd.s32 %s209, 1
      %s211 = scalar_select %p208, %s209, %s210
      %p214 = pneg %p208
      %p215 = scmp.eq.s32.totalorder %s32, 1
      %p216 = por %p214, %p215
      %p217 = scmp.ne.s32.totalorder %s209, %s212
      %p218 = scmp.eq.s32.totalorder %s32, 0
      %p219 = por %p217, %p218
      %p220 = scmp.ne.s32.totalorder %s209, %s212
      %p221 = scmp.eq.s32.totalorder %s37, 1
      %p222 = por %p220, %p221
      %p223 = scmp.ne.s32.totalorder %s212, %s213
      %p224 = scmp.eq.s32.totalorder %s37, 0
      %p225 = por %p223, %p224
      %p226 = scmp.ne.s32.totalorder %s212, %s213
      %p227 = scmp.eq.s32.totalorder %s38, 1
      %p228 = por %p226, %p227
      %p230 = scmp.ne.s32.totalorder %s213, %s229
      %p231 = scmp.eq.s32.totalorder %s38, 0
      %p232 = por %p230, %p231
      %s233 = ssub.s32 %s32, %s39
      %p234 = scmp.eq.s32.totalorder %s233, 0
      %s236 = sadd.s32 %s235, 1
      %s237 = scalar_select %p234, %s235, %s236
      %p240 = pneg %p234
      %p241 = scmp.eq.s32.totalorder %s32, 1
      %p242 = por %p240, %p241
      %p243 = scmp.ne.s32.totalorder %s235, %s238
      %p244 = scmp.eq.s32.totalorder %s32, 0
      %p245 = por %p243, %p244
      %p246 = scmp.ne.s32.totalorder %s235, %s238
      %p247 = scmp.eq.s32.totalorder %s37, 1
      %p248 = por %p246, %p247
      %p249 = scmp.ne.s32.totalorder %s238, %s239
      %p250 = scmp.eq.s32.totalorder %s37, 0
      %p251 = por %p249, %p250
      %p252 = scmp.ne.s32.totalorder %s238, %s239
      %p253 = scmp.eq.s32.totalorder %s38, 1
      %p254 = por %p252, %p253
      %p256 = scmp.ne.s32.totalorder %s239, %s255
      %p257 = scmp.eq.s32.totalorder %s38, 0
      %p258 = por %p256, %p257
      %s259 = ssub.s32 %s32, %s39
      %p260 = scmp.eq.s32.totalorder %s259, 0
      %s262 = sadd.s32 %s261, 1
      %s263 = scalar_select %p260, %s261, %s262
      %p266 = pneg %p260
      %p267 = scmp.eq.s32.totalorder %s32, 1
      %p268 = por %p266, %p267
      %p269 = scmp.ne.s32.totalorder %s261, %s264
      %p270 = scmp.eq.s32.totalorder %s32, 0
      %p271 = por %p269, %p270
      %p272 = scmp.ne.s32.totalorder %s261, %s264
      %p273 = scmp.eq.s32.totalorder %s37, 1
      %p274 = por %p272, %p273
      %p275 = scmp.ne.s32.totalorder %s264, %s265
      %p276 = scmp.eq.s32.totalorder %s37, 0
      %p277 = por %p275, %p276
      %p278 = scmp.ne.s32.totalorder %s264, %s265
      %p279 = scmp.eq.s32.totalorder %s38, 1
      %p280 = por %p278, %p279
      %p282 = scmp.ne.s32.totalorder %s265, %s281
      %p283 = scmp.eq.s32.totalorder %s38, 0
      %p284 = por %p282, %p283
      %s285 = ssub.s32 %s32, %s39
      %p286 = scmp.eq.s32.totalorder %s285, 0
      %s288 = sadd.s32 %s287, 1
      %s289 = scalar_select %p286, %s287, %s288
      %p292 = pneg %p286
      %p293 = scmp.eq.s32.totalorder %s32, 1
      %p294 = por %p292, %p293
      %p295 = scmp.ne.s32.totalorder %s287, %s290
      %p296 = scmp.eq.s32.totalorder %s32, 0
      %p297 = por %p295, %p296
      %p298 = scmp.ne.s32.totalorder %s287, %s290
      %p299 = scmp.eq.s32.totalorder %s37, 1
      %p300 = por %p298, %p299
      %p301 = scmp.ne.s32.totalorder %s290, %s291
      %p302 = scmp.eq.s32.totalorder %s37, 0
      %p303 = por %p301, %p302
      %p304 = scmp.ne.s32.totalorder %s290, %s291
      %p305 = scmp.eq.s32.totalorder %s38, 1
      %p306 = por %p304, %p305
      %p308 = scmp.ne.s32.totalorder %s291, %s307
      %p309 = scmp.eq.s32.totalorder %s38, 0
      %p310 = por %p308, %p309
      %s311 = ssub.s32 %s32, %s39
      %p312 = scmp.eq.s32.totalorder %s311, 0
      %s314 = sadd.s32 %s313, 1
      %s315 = scalar_select %p312, %s313, %s314
      %p318 = pneg %p312
      %p319 = scmp.eq.s32.totalorder %s32, 1
      %p320 = por %p318, %p319
      %p321 = scmp.ne.s32.totalorder %s313, %s316
      %p322 = scmp.eq.s32.totalorder %s32, 0
      %p323 = por %p321, %p322
      %p324 = scmp.ne.s32.totalorder %s313, %s316
      %p325 = scmp.eq.s32.totalorder %s37, 1
      %p326 = por %p324, %p325
      %p327 = scmp.ne.s32.totalorder %s316, %s317
      %p328 = scmp.eq.s32.totalorder %s37, 0
      %p329 = por %p327, %p328
      %p330 = scmp.ne.s32.totalorder %s316, %s317
      %p331 = scmp.eq.s32.totalorder %s38, 1
      %p332 = por %p330, %p331
      %p334 = scmp.ne.s32.totalorder %s317, %s333
      %p335 = scmp.eq.s32.totalorder %s38, 0
      %p336 = por %p334, %p335
      %s337 = ssub.s32 %s32, %s39
      %p338 = scmp.eq.s32.totalorder %s337, 0
      %s340 = sadd.s32 %s339, 1
      %s341 = scalar_select %p338, %s339, %s340
      %p344 = pneg %p338
      %p345 = scmp.eq.s32.totalorder %s32, 1
      %p346 = por %p344, %p345
      %p347 = scmp.ne.s32.totalorder %s339, %s342
      %p348 = scmp.eq.s32.totalorder %s32, 0
      %p349 = por %p347, %p348
      %p350 = scmp.ne.s32.totalorder %s339, %s342
      %p351 = scmp.eq.s32.totalorder %s37, 1
      %p352 = por %p350, %p351
      %p353 = scmp.ne.s32.totalorder %s342, %s343
      %p354 = scmp.eq.s32.totalorder %s37, 0
      %p355 = por %p353, %p354
      %p356 = scmp.ne.s32.totalorder %s342, %s343
      %p357 = scmp.eq.s32.totalorder %s38, 1
      %p358 = por %p356, %p357
      %p360 = scmp.ne.s32.totalorder %s343, %s359
      %p361 = scmp.eq.s32.totalorder %s38, 0
      %p362 = por %p360, %p361
      %s363 = ssub.s32 %s32, %s39
      %p364 = scmp.eq.s32.totalorder %s363, 0
      %s366 = sadd.s32 %s365, 1
      %s367 = scalar_select %p364, %s365, %s366
      %p370 = pneg %p364
      %p371 = scmp.eq.s32.totalorder %s32, 1
      %p372 = por %p370, %p371
      %p373 = scmp.ne.s32.totalorder %s365, %s368
      %p374 = scmp.eq.s32.totalorder %s32, 0
      %p375 = por %p373, %p374
      %p376 = scmp.ne.s32.totalorder %s365, %s368
      %p377 = scmp.eq.s32.totalorder %s37, 1
      %p378 = por %p376, %p377
      %p379 = scmp.ne.s32.totalorder %s368, %s369
      %p380 = scmp.eq.s32.totalorder %s37, 0
      %p381 = por %p379, %p380
      %p382 = scmp.ne.s32.totalorder %s368, %s369
      %p383 = scmp.eq.s32.totalorder %s38, 1
      %p384 = por %p382, %p383
      %p386 = scmp.ne.s32.totalorder %s369, %s385
      %p387 = scmp.eq.s32.totalorder %s38, 0
      %p388 = por %p386, %p387
      %s389 = ssub.s32 %s32, %s39
      %p390 = scmp.eq.s32.totalorder %s389, 0
      %s392 = sadd.s32 %s391, 1
      %s393 = scalar_select %p390, %s391, %s392
      %p396 = pneg %p390
      %p397 = scmp.eq.s32.totalorder %s32, 1
      %p398 = por %p396, %p397
      %p399 = scmp.ne.s32.totalorder %s391, %s394
      %p400 = scmp.eq.s32.totalorder %s32, 0
      %p401 = por %p399, %p400
      %p402 = scmp.ne.s32.totalorder %s391, %s394
      %p403 = scmp.eq.s32.totalorder %s37, 1
      %p404 = por %p402, %p403
      %p405 = scmp.ne.s32.totalorder %s394, %s395
      %p406 = scmp.eq.s32.totalorder %s37, 0
      %p407 = por %p405, %p406
      %p408 = scmp.ne.s32.totalorder %s394, %s395
      %p409 = scmp.eq.s32.totalorder %s38, 1
      %p410 = por %p408, %p409
      %p412 = scmp.ne.s32.totalorder %s395, %s411
      %p413 = scmp.eq.s32.totalorder %s38, 0
      %p414 = por %p412, %p413
      %s416 = sadd.s32 %s415, 1
      %p419 = scmp.eq.s32.totalorder %s32, 1
      %p420 = scmp.ne.s32.totalorder %s415, %s417
      %p421 = scmp.eq.s32.totalorder %s32, 0
      %p422 = por %p420, %p421
      %p423 = scmp.ne.s32.totalorder %s415, %s417
      %p424 = scmp.eq.s32.totalorder %s37, 1
      %p425 = por %p423, %p424
      %p426 = scmp.ne.s32.totalorder %s417, %s418
      %p427 = scmp.eq.s32.totalorder %s37, 0
      %p428 = por %p426, %p427
      %p429 = scmp.ne.s32.totalorder %s417, %s418
      %p430 = scmp.eq.s32.totalorder %s38, 1
      %p431 = por %p429, %p430
      %p433 = scmp.ne.s32.totalorder %s418, %s432
      %p434 = scmp.eq.s32.totalorder %s38, 0
      %p435 = por %p433, %p434
      %s437 = sadd.s32 %s436, 1
      %p440 = scmp.eq.s32.totalorder %s32, 1
      %p441 = scmp.ne.s32.totalorder %s436, %s438
      %p442 = scmp.eq.s32.totalorder %s32, 0
      %p443 = por %p441, %p442
      %p444 = scmp.ne.s32.totalorder %s436, %s438
      %p445 = scmp.eq.s32.totalorder %s37, 1
      %p446 = por %p444, %p445
      %p447 = scmp.ne.s32.totalorder %s438, %s439
      %p448 = scmp.eq.s32.totalorder %s37, 0
      %p449 = por %p447, %p448
      %p450 = scmp.ne.s32.totalorder %s438, %s439
      %p451 = scmp.eq.s32.totalorder %s38, 1
      %p452 = por %p450, %p451
      %p454 = scmp.ne.s32.totalorder %s439, %s453
      %p455 = scmp.eq.s32.totalorder %s38, 0
      %p456 = por %p454, %p455
      %s458 = sadd.s32 %s457, 1
      %p461 = scmp.eq.s32.totalorder %s32, 1
      %p462 = scmp.ne.s32.totalorder %s457, %s459
      %p463 = scmp.eq.s32.totalorder %s32, 0
      %p464 = por %p462, %p463
      %p465 = scmp.ne.s32.totalorder %s457, %s459
      %p466 = scmp.eq.s32.totalorder %s37, 1
      %p467 = por %p465, %p466
      %p468 = scmp.ne.s32.totalorder %s459, %s460
      %p469 = scmp.eq.s32.totalorder %s37, 0
      %p470 = por %p468, %p469
      %p471 = scmp.ne.s32.totalorder %s459, %s460
      %p472 = scmp.eq.s32.totalorder %s38, 1
      %p473 = por %p471, %p472
      %p475 = scmp.ne.s32.totalorder %s460, %s474
      %p476 = scmp.eq.s32.totalorder %s38, 0
      %p477 = por %p475, %p476
      %s479 = sadd.s32 %s478, 1
      %p482 = scmp.eq.s32.totalorder %s32, 1
      %p483 = scmp.ne.s32.totalorder %s478, %s480
      %p484 = scmp.eq.s32.totalorder %s32, 0
      %p485 = por %p483, %p484
      %p486 = scmp.ne.s32.totalorder %s478, %s480
      %p487 = scmp.eq.s32.totalorder %s37, 1
      %p488 = por %p486, %p487
      %p489 = scmp.ne.s32.totalorder %s480, %s481
      %p490 = scmp.eq.s32.totalorder %s37, 0
      %p491 = por %p489, %p490
      %p492 = scmp.ne.s32.totalorder %s480, %s481
      %p493 = scmp.eq.s32.totalorder %s38, 1
      %p494 = por %p492, %p493
      %p496 = scmp.ne.s32.totalorder %s481, %s495
      %p497 = scmp.eq.s32.totalorder %s38, 0
      %p498 = por %p496, %p497
      %p499 = scmp.le.s32.totalorder 1, %s32
      %p500 = scmp.lt.s32.totalorder %s32, 3
      %p501 = pnand %p499, %p500
      %p502 = pneg %p501
      // Predicated region
      $region9: #{text_encoder.1} parent=5 // pred_check
        _
      $region10: #{text_encoder.1} parent=5 // pred_check_branch
        %504 = sbr.rel (%p501) target = $region12
      $region11: #{text_encoder.1} parent=5 // pred_region
        %s505 = ssub.s32 %s32, 1
        // Predicated region
        $region13: #{text_encoder.1} parent=11 // pred_check
          %p506 = pneg %p53
        $region14: #{text_encoder.1} parent=11 // pred_check_branch
          %508 = sbr.rel (%p506) target = $region16
        $region15: #{text_encoder.1} parent=11 // pred_region
          _
        $region16: #{text_encoder.1} parent=11 // pred_fallthru
          _
        // Predicated region
        $region17: #{text_encoder.1} parent=11 // pred_check
          %p509 = pneg %p74
        $region18: #{text_encoder.1} parent=11 // pred_check_branch
          %511 = sbr.rel (%p509) target = $region20
        $region19: #{text_encoder.1} parent=11 // pred_region
          _
        $region20: #{text_encoder.1} parent=11 // pred_fallthru
          _
        // Predicated region
        $region21: #{text_encoder.1} parent=11 // pred_check
          %p512 = pneg %p95
        $region22: #{text_encoder.1} parent=11 // pred_check_branch
          %514 = sbr.rel (%p512) target = $region24
        $region23: #{text_encoder.1} parent=11 // pred_region
          _
        $region24: #{text_encoder.1} parent=11 // pred_fallthru
          _
        // Predicated region
        $region25: #{text_encoder.1} parent=11 // pred_check
          %p515 = pneg %p428
        $region26: #{text_encoder.1} parent=11 // pred_check_branch
          %517 = sbr.rel (%p515) target = $region28
        $region27: #{text_encoder.1} parent=11 // pred_region
          _
        $region28: #{text_encoder.1} parent=11 // pred_fallthru
          _
        // Predicated region
        $region29: #{text_encoder.1} parent=11 // pred_check
          %p518 = pneg %p449
        $region30: #{text_encoder.1} parent=11 // pred_check_branch
          %520 = sbr.rel (%p518) target = $region32
        $region31: #{text_encoder.1} parent=11 // pred_region
          _
        $region32: #{text_encoder.1} parent=11 // pred_fallthru
          _
        // Predicated region
        $region33: #{text_encoder.1} parent=11 // pred_check
          %p521 = pneg %p470
        $region34: #{text_encoder.1} parent=11 // pred_check_branch
          %523 = sbr.rel (%p521) target = $region36
        $region35: #{text_encoder.1} parent=11 // pred_region
          _
        $region36: #{text_encoder.1} parent=11 // pred_fallthru
          _
      $region12: #{text_encoder.1} parent=5 // pred_fallthru
        _
      %p524 = scmp.lt.s32.totalorder %s32, 2
      // Predicated region
      $region37: #{text_encoder.1} parent=5 // pred_check
        %p525 = pneg %p524
      $region38: #{text_encoder.1} parent=5 // pred_check_branch
        %527 = sbr.rel (%p525) target = $region40
      $region39: #{text_encoder.1} parent=5 // pred_region
        // Predicated region
        $region41: #{text_encoder.1} parent=39 // pred_check
          %p528 = pneg %p115
        $region42: #{text_encoder.1} parent=39 // pred_check_branch
          %530 = sbr.rel (%p528) target = $region44
        $region43: #{text_encoder.1} parent=39 // pred_region
          %p531 = scmp.lt.s32.totalorder %s32, 1
          %s532 = scalar_select %p531, %s32, 1
          %s533 = scalar_lea.vmem %s4, %s532
        $region44: #{text_encoder.1} parent=39 // pred_fallthru
          _
        // Predicated region
        $region45: #{text_encoder.1} parent=39 // pred_check
          %p534 = pneg %p141
        $region46: #{text_encoder.1} parent=39 // pred_check_branch
          %536 = sbr.rel (%p534) target = $region48
        $region47: #{text_encoder.1} parent=39 // pred_region
          %p537 = scmp.lt.s32.totalorder %s32, 1
          %s538 = scalar_select %p537, %s32, 1
          %s539 = scalar_lea.vmem %s5, %s538
        $region48: #{text_encoder.1} parent=39 // pred_fallthru
          _
        // Predicated region
        $region49: #{text_encoder.1} parent=39 // pred_check
          %p540 = pneg %p167
        $region50: #{text_encoder.1} parent=39 // pred_check_branch
          %542 = sbr.rel (%p540) target = $region52
        $region51: #{text_encoder.1} parent=39 // pred_region
          %p543 = scmp.lt.s32.totalorder %s32, 1
          %s544 = scalar_select %p543, %s32, 1
          %s545 = smul.addr %s544, 4
          %s546 = smul.addr %s545, 8
          %s547 = scalar_lea.vmem %s6, %s546
        $region52: #{text_encoder.1} parent=39 // pred_fallthru
          _
        // Predicated region
        $region53: #{text_encoder.1} parent=39 // pred_check
          %p548 = pneg %p193
        $region54: #{text_encoder.1} parent=39 // pred_check_branch
          %550 = sbr.rel (%p548) target = $region56
        $region55: #{text_encoder.1} parent=39 // pred_region
          %p551 = scmp.lt.s32.totalorder %s32, 1
          %s552 = scalar_select %p551, %s32, 1
          %s553 = scalar_lea.vmem %s7, %s552
        $region56: #{text_encoder.1} parent=39 // pred_fallthru
          _
        // Predicated region
        $region57: #{text_encoder.1} parent=39 // pred_check
          %p554 = pneg %p219
        $region58: #{text_encoder.1} parent=39 // pred_check_branch
          %556 = sbr.rel (%p554) target = $region60
        $region59: #{text_encoder.1} parent=39 // pred_region
          %p557 = scmp.lt.s32.totalorder %s32, 1
          %s558 = scalar_select %p557, %s32, 1
          %s559 = smul.addr %s558, 4
          %s560 = smul.addr %s559, 8
          %s561 = scalar_lea.vmem %s8, %s560
        $region60: #{text_encoder.1} parent=39 // pred_fallthru
          _
        // Predicated region
        $region61: #{text_encoder.1} parent=39 // pred_check
          %p562 = pneg %p245
        $region62: #{text_encoder.1} parent=39 // pred_check_branch
          %564 = sbr.rel (%p562) target = $region64
        $region63: #{text_encoder.1} parent=39 // pred_region
          %p565 = scmp.lt.s32.totalorder %s32, 1
          %s566 = scalar_select %p565, %s32, 1
          %s567 = scalar_lea.vmem %s9, %s566
        $region64: #{text_encoder.1} parent=39 // pred_fallthru
          _
        // Predicated region
        $region65: #{text_encoder.1} parent=39 // pred_check
          %p568 = pneg %p271
        $region66: #{text_encoder.1} parent=39 // pred_check_branch
          %570 = sbr.rel (%p568) target = $region68
        $region67: #{text_encoder.1} parent=39 // pred_region
          %p571 = scmp.lt.s32.totalorder %s32, 1
          %s572 = scalar_select %p571, %s32, 1
          %s573 = scalar_lea.vmem %s10, %s572
        $region68: #{text_encoder.1} parent=39 // pred_fallthru
          _
        // Predicated region
        $region69: #{text_encoder.1} parent=39 // pred_check
          %p574 = pneg %p297
        $region70: #{text_encoder.1} parent=39 // pred_check_branch
          %576 = sbr.rel (%p574) target = $region72
        $region71: #{text_encoder.1} parent=39 // pred_region
          %p577 = scmp.lt.s32.totalorder %s32, 1
          %s578 = scalar_select %p577, %s32, 1
          %s579 = scalar_lea.vmem %s11, %s578
        $region72: #{text_encoder.1} parent=39 // pred_fallthru
          _
        // Predicated region
        $region73: #{text_encoder.1} parent=39 // pred_check
          %p580 = pneg %p323
        $region74: #{text_encoder.1} parent=39 // pred_check_branch
          %582 = sbr.rel (%p580) target = $region76
        $region75: #{text_encoder.1} parent=39 // pred_region
          %p583 = scmp.lt.s32.totalorder %s32, 1
          %s584 = scalar_select %p583, %s32, 1
          %s585 = smul.addr %s584, 4
          %s586 = smul.addr %s585, 8
          %s587 = scalar_lea.vmem %s12, %s586
        $region76: #{text_encoder.1} parent=39 // pred_fallthru
          _
        // Predicated region
        $region77: #{text_encoder.1} parent=39 // pred_check
          %p588 = pneg %p349
        $region78: #{text_encoder.1} parent=39 // pred_check_branch
          %590 = sbr.rel (%p588) target = $region80
        $region79: #{text_encoder.1} parent=39 // pred_region
          %p591 = scmp.lt.s32.totalorder %s32, 1
          %s592 = scalar_select %p591, %s32, 1
          %s593 = scalar_lea.vmem %s13, %s592
        $region80: #{text_encoder.1} parent=39 // pred_fallthru
          _
        // Predicated region
        $region81: #{text_encoder.1} parent=39 // pred_check
          %p594 = pneg %p375
        $region82: #{text_encoder.1} parent=39 // pred_check_branch
          %596 = sbr.rel (%p594) target = $region84
        $region83: #{text_encoder.1} parent=39 // pred_region
          %p597 = scmp.lt.s32.totalorder %s32, 1
          %s598 = scalar_select %p597, %s32, 1
          %s599 = smul.addr %s598, 16
          %s600 = smul.addr %s599, 8
          %s601 = scalar_lea.vmem %s14, %s600
        $region84: #{text_encoder.1} parent=39 // pred_fallthru
          _
        // Predicated region
        $region85: #{text_encoder.1} parent=39 // pred_check
          %p602 = pneg %p401
        $region86: #{text_encoder.1} parent=39 // pred_check_branch
          %604 = sbr.rel (%p602) target = $region88
        $region87: #{text_encoder.1} parent=39 // pred_region
          %p605 = scmp.lt.s32.totalorder %s32, 1
          %s606 = scalar_select %p605, %s32, 1
          %s607 = scalar_lea.vmem %s15, %s606
        $region88: #{text_encoder.1} parent=39 // pred_fallthru
          _
      $region40: #{text_encoder.1} parent=5 // pred_fallthru
        _
      %p608 = scmp.le.s32.totalorder 1, %s32
      %p609 = scmp.lt.s32.totalorder %s32, 3
      %p610 = pnand %p608, %p609
      %p611 = pneg %p610
      // Predicated region
      $region89: #{text_encoder.1} parent=5 // pred_check
        _
      $region90: #{text_encoder.1} parent=5 // pred_check_branch
        %613 = sbr.rel (%p610) target = $region92
      $region91: #{text_encoder.1} parent=5 // pred_region
        %s614 = ssub.s32 %s32, 1
        %p615 = pneg %p53
        %p616 = pneg %p50
        %p617 = pneg %p74
        %p618 = pneg %p71
        %p619 = pneg %p95
        %p620 = pneg %p92
        %p621 = scmp.lt.s32.totalorder %s37, 1
        %s622 = scalar_select %p621, %s37, 1
        %s623 = scalar_lea.vmem %s4, %s622
        %p624 = pneg %p121
        %p625 = pneg %p118
        %p626 = scmp.lt.s32.totalorder %s37, 1
        %s627 = scalar_select %p626, %s37, 1
        %s628 = scalar_lea.vmem %s5, %s627
        %p629 = pneg %p147
        %p630 = pneg %p144
        %p631 = scmp.lt.s32.totalorder %s37, 1
        %s632 = scalar_select %p631, %s37, 1
        %s633 = smul.addr %s632, 4
        %s634 = smul.addr %s633, 8
        %s635 = scalar_lea.vmem %s6, %s634
        %p636 = pneg %p173
        %p637 = pneg %p170
        %p638 = scmp.lt.s32.totalorder %s37, 1
        %s639 = scalar_select %p638, %s37, 1
        %s640 = scalar_lea.vmem %s7, %s639
        %p641 = pneg %p199
        %p642 = pneg %p196
        %p643 = scmp.lt.s32.totalorder %s37, 1
        %s644 = scalar_select %p643, %s37, 1
        %s645 = smul.addr %s644, 4
        %s646 = smul.addr %s645, 8
        %s647 = scalar_lea.vmem %s8, %s646
        %p648 = pneg %p225
        %p649 = pneg %p222
        %p650 = scmp.lt.s32.totalorder %s37, 1
        %s651 = scalar_select %p650, %s37, 1
        %s652 = scalar_lea.vmem %s9, %s651
        %p653 = pneg %p251
        %p654 = pneg %p248
        %p655 = scmp.lt.s32.totalorder %s37, 1
        %s656 = scalar_select %p655, %s37, 1
        %s657 = scalar_lea.vmem %s10, %s656
        %p658 = pneg %p277
        %p659 = pneg %p274
        %p660 = scmp.lt.s32.totalorder %s37, 1
        %s661 = scalar_select %p660, %s37, 1
        %s662 = scalar_lea.vmem %s11, %s661
        %p663 = pneg %p303
        %p664 = pneg %p300
        %p665 = scmp.lt.s32.totalorder %s37, 1
        %s666 = scalar_select %p665, %s37, 1
        %s667 = smul.addr %s666, 4
        %s668 = smul.addr %s667, 8
        %s669 = scalar_lea.vmem %s12, %s668
        %p670 = pneg %p329
        %p671 = pneg %p326
        %p672 = scmp.lt.s32.totalorder %s37, 1
        %s673 = scalar_select %p672, %s37, 1
        %s674 = scalar_lea.vmem %s13, %s673
        %p675 = pneg %p355
        %p676 = pneg %p352
        %p677 = scmp.lt.s32.totalorder %s37, 1
        %s678 = scalar_select %p677, %s37, 1
        %s679 = smul.addr %s678, 16
        %s680 = smul.addr %s679, 8
        %s681 = scalar_lea.vmem %s14, %s680
        %p682 = pneg %p381
        %p683 = pneg %p378
        %p684 = scmp.lt.s32.totalorder %s37, 1
        %s685 = scalar_select %p684, %s37, 1
        %s686 = scalar_lea.vmem %s15, %s685
        %p687 = pneg %p407
        %p688 = pneg %p404
        %p689 = pneg %p428
        %p690 = pneg %p425
        %p691 = pneg %p449
        %p692 = pneg %p446
        %p693 = pneg %p470
        %p694 = pneg %p467
        %p695 = pneg %p491
        %p696 = pneg %p488
        %p697 = scmp.lt.s32.totalorder %s37, 1
        %s698 = scalar_select %p697, %s37, 1
        %s699 = scalar_lea.vmem %s4, %s698
        %p700 = scmp.lt.s32.totalorder %s37, 1
        %s701 = scalar_select %p700, %s37, 1
        %s702 = scalar_lea.vmem %s5, %s701
        %p703 = scmp.lt.s32.totalorder %s37, 1
        %s704 = scalar_select %p703, %s37, 1
        %s705 = smul.addr %s704, 4
        %s706 = smul.addr %s705, 8
        %s707 = scalar_lea.vmem %s6, %s706
        %p708 = scmp.lt.s32.totalorder %s37, 1
        %s709 = scalar_select %p708, %s37, 1
        %s710 = scalar_lea.vmem %s7, %s709
        %p711 = scmp.lt.s32.totalorder %s37, 1
        %s712 = scalar_select %p711, %s37, 1
        %s713 = smul.addr %s712, 4
        %s714 = smul.addr %s713, 8
        %s715 = scalar_lea.vmem %s8, %s714
        %p716 = scmp.lt.s32.totalorder %s37, 1
        %s717 = scalar_select %p716, %s37, 1
        %s718 = scalar_lea.vmem %s9, %s717
        %p719 = scmp.lt.s32.totalorder %s37, 1
        %s720 = scalar_select %p719, %s37, 1
        %s721 = scalar_lea.vmem %s10, %s720
        %p722 = scmp.lt.s32.totalorder %s37, 1
        %s723 = scalar_select %p722, %s37, 1
        %s724 = scalar_lea.vmem %s11, %s723
        %p725 = scmp.lt.s32.totalorder %s37, 1
        %s726 = scalar_select %p725, %s37, 1
        %s727 = smul.addr %s726, 4
        %s728 = smul.addr %s727, 8
        %s729 = scalar_lea.vmem %s12, %s728
        %p730 = scmp.lt.s32.totalorder %s37, 1
        %s731 = scalar_select %p730, %s37, 1
        %s732 = scalar_lea.vmem %s13, %s731
        %p733 = scmp.lt.s32.totalorder %s37, 1
        %s734 = scalar_select %p733, %s37, 1
        %s735 = smul.addr %s734, 16
        %s736 = smul.addr %s735, 8
        %s737 = scalar_lea.vmem %s14, %s736
        %p738 = scmp.lt.s32.totalorder %s37, 1
        %s739 = scalar_select %p738, %s37, 1
        %s740 = scalar_lea.vmem %s15, %s739
        %p741 = scmp.eq.s32.totalorder %s37, 0
        // Predicated region
        $region93: #{text_encoder.1} parent=91 // pred_check
          %p742 = pneg %p741
        $region94: #{text_encoder.1} parent=91 // pred_check_branch
          %744 = sbr.rel (%p742) target = $region96
        $region95: #{text_encoder.1} parent=91 // pred_region
          %v745 = vld [vmem:[%s1] sm:$0xff]
          %v746 = vld [vmem:[%s1 + $0x8] sm:$0xff]
          %vm747 = vcmask 261120
          %748 = vst.msk [vmem:[#allocation2] sm:$0xff] %vm747, %v745
          %749 = vst.msk [vmem:[#allocation2 + $0x8] sm:$0xff] %vm747, %v746
        $region96: #{text_encoder.1} parent=91 // pred_fallthru
          _
        %v750 = vld [vmem:[#allocation2] sm:$0xff]
        %v751 = vld [vmem:[#allocation2 + $0x8] sm:$0xff]
        %v752 = vld [vmem:[%s699] sm:$0x1]
        %v753 = vld [vmem:[%s702] sm:$0x1]
        %vm754 = vcmask 261120
        %v755 = vsel %vm754, %v750, 0.0
        %756 = vadd.xlane.f32.xlu0 %v755
        %v757 = vpop.xlane.xlu0 %756
        %v758 = vsel %vm754, %v751, 0.0
        %759 = vadd.xlane.f32.xlu0 %v758
        %v760 = vpop.xlane.xlu0 %759
        %v761 = vrcp.pop 32.0
        %v762 = vmul.f32 %v757, %v761
        %v763 = vmul.f32 %v760, %v761
        %v764 = vsub.f32 %v750, %v762
        %v765 = vsub.f32 %v751, %v763
        %v766 = vmul.f32 %v764, %v764
        %v767 = vmul.f32 %v765, %v765
        %v768 = vsel %vm754, %v766, 0.0
        %769 = vadd.xlane.f32.xlu0 %v768
        %v770 = vpop.xlane.xlu0 %769
        %v771 = vsel %vm754, %v767, 0.0
        %772 = vadd.xlane.f32.xlu0 %v771
        %v773 = vpop.xlane.xlu0 %772
        %v774 = vmul.f32 %v770, %v761
        %v775 = vmul.f32 %v773, %v761
        %v776 = vadd.f32 %v774, 1e-05
        %v777 = vadd.f32 %v775, 1e-05
        %v778 = vrsqrt.pop %v776
        %v779 = vrsqrt.pop %v777
        %v780 = vmul.f32 %v764, %v778
        %v781 = vmul.f32 %v765, %v779
        %v783 = vlaneseq
        %v784 = vshrl.u32 %v783, 7
        %v785 = vsub.s32 0, %v784
        %v786 = vrot.slane %v752, %v785
        %v788 = vmul.f32 %v780, %v786
        %v789 = vmul.f32 %v781, %v786
        %v791 = vlaneseq
        %v792 = vshrl.u32 %v791, 7
        %v793 = vsub.s32 0, %v792
        %v794 = vrot.slane %v753, %v793
        %v796 = vadd.f32 %v788, %v794
        %v797 = vadd.f32 %v789, %v794
        %v798 = vld [vmem:[%s707] sm:$0xff]
        %v799 = vld [vmem:[%s707 + $0x8] sm:$0xff]
        %v800 = vld [vmem:[%s707 + $0x10] sm:$0xff]
        %v801 = vld [vmem:[%s707 + $0x18] sm:$0xff]
        %v802 = vld [vmem:[%s710] sm:$0x1]
        %v804 = vlaneseq
        %v805 = vshrl.u32 %v804, 7
        %v806 = vsub.s32 0, %v805
        %v807 = vrot.slane %v802, %v806
        %v810 = vsel %vm754, %v796, 0
        %v813 = vsel %vm754, %v797, 0
        %815 = vmatprep.subr.mxu0 0.0
        %816 = vmatpush1.msra.mxu0 %v798
        %817 = vmatprep.subr.mxu0 0.0
        %818 = vmatpush1.msra.mxu0 %v799
        %819 = vmatprep.subr.mxu0 0.0
        %820 = vmatpush1.msra.mxu0 %v800
        %821 = vmatprep.subr.mxu0 0.0
        %822 = vmatpush1.msra.mxu0 %v801
        %823 = vmatprep.subr.mxu0 0.0
        %824 = vmatpush1.msra.mxu0 0.0
        %825 = vmatprep.subr.mxu0 0.0
        %826 = vmatpush1.msra.mxu0 0.0
        %827 = vmatprep.subr.mxu0 0.0
        %828 = vmatpush1.msra.mxu0 0.0
        %829 = vmatprep.subr.mxu0 0.0
        %830 = vmatpush1.msra.mxu0 0.0
        %831 = vmatprep.subr.mxu0 0.0
        %832 = vmatpush1.msra.mxu0 0.0
        %833 = vmatprep.subr.mxu0 0.0
        %834 = vmatpush1.msra.mxu0 0.0
        %835 = vmatprep.subr.mxu0 0.0
        %836 = vmatpush1.msra.mxu0 0.0
        %837 = vmatprep.subr.mxu0 0.0
        %838 = vmatpush1.msra.mxu0 0.0
        %839 = vmatprep.subr.mxu0 0.0
        %840 = vmatpush1.msra.mxu0 0.0
        %841 = vmatprep.subr.mxu0 0.0
        %842 = vmatpush1.msra.mxu0 0.0
        %843 = vmatprep.subr.mxu0 0.0
        %844 = vmatpush1.msra.mxu0 0.0
        %845 = vmatprep.subr.mxu0 0.0
        %846 = vmatpush1.msra.mxu0 0.0
        %847 = vmatprep.subr.mxu0 0.0
        %848 = vmatpush1.msra.mxu0 0.0
        %849 = vmatprep.subr.mxu0 0.0
        %850 = vmatpush1.msra.mxu0 0.0
        %851 = vmatprep.subr.mxu0 0.0
        %852 = vmatpush1.msra.mxu0 0.0
        %853 = vmatprep.subr.mxu0 0.0
        %854 = vmatpush1.msra.mxu0 0.0
        %855 = vmatprep.subr.mxu0 0.0
        %856 = vmatpush1.msra.mxu0 0.0
        %857 = vmatprep.subr.mxu0 0.0
        %858 = vmatpush1.msra.mxu0 0.0
        %859 = vmatprep.subr.mxu0 0.0
        %860 = vmatpush1.msra.mxu0 0.0
        %861 = vmatprep.subr.mxu0 0.0
        %862 = vmatpush1.msra.mxu0 0.0
        %863 = vmatprep.subr.mxu0 0.0
        %864 = vmatpush1.msra.mxu0 0.0
        %865 = vmatprep.subr.mxu0 0.0
        %866 = vmatpush1.msra.mxu0 0.0
        %867 = vmatprep.subr.mxu0 0.0
        %868 = vmatpush1.msra.mxu0 0.0
        %869 = vmatprep.subr.mxu0 0.0
        %870 = vmatpush1.msra.mxu0 0.0
        %871 = vmatprep.subr.mxu0 0.0
        %872 = vmatpush1.msra.mxu0 0.0
        %873 = vmatprep.subr.mxu0 0.0
        %874 = vmatpush1.msra.mxu0 0.0
        %875 = vmatprep.subr.mxu0 0.0
        %876 = vmatpush1.msra.mxu0 0.0
        %877 = vmatprep.subr.mxu0 0.0
        %878 = vmatpush1.msra.mxu0 0.0
        %879 = vmatprep.mubr.f32.mxu0 0.0
        %880 = vmatmul.mubr.f32.gmra.mrb[0].mxu0 %v810
        %v881 = vpop.f32.mrb[0].mxu0
        %v882 = vadd.f32 %v807, %v881
        %v883 = vpop.f32.mrb[0].mxu0
        %884 = vmatprep.mubr.f32.mxu0 0.0
        %885 = vmatmul.mubr.f32.gmra.mrb[0].mxu0 %v813
        %v886 = vpop.f32.mrb[0].mxu0
        %v887 = vadd.f32 %v807, %v886
        %v888 = vpop.f32.mrb[0].mxu0
        %889 = vdwg.mxu0
        %v890 = vld [vmem:[%s2] sm:$0xff]
        %v891 = vld [vmem:[%s2 + $0x8] sm:$0xff]
        %v892 = vld [vmem:[%s2 + $0x10] sm:$0xff]
        %v893 = vld [vmem:[%s2 + $0x18] sm:$0xff]
        %v894 = vld [vmem:[%s2 + $0x20] sm:$0xff]
        %v895 = vld [vmem:[%s2 + $0x28] sm:$0xff]
        %v896 = vld [vmem:[%s2 + $0x30] sm:$0xff]
        %v897 = vld [vmem:[%s2 + $0x38] sm:$0xff]
        %v898 = vmul.f32 %v882, 0.35355338
        %v899 = vmul.f32 %v887, 0.35355338
        %v900 = vmul.f32 %v898, %v890
        %v901 = vmul.f32 %v899, %v891
        %v902 = vmul.f32 %v898, %v892
        %v903 = vmul.f32 %v899, %v893
        %v904 = vmul.f32 %v898, %v894
        %v905 = vmul.f32 %v899, %v895
        %v906 = vmul.f32 %v898, %v896
        %v907 = vmul.f32 %v899, %v897
        %v908 = vld [vmem:[%s3] sm:$0xff]
        %v909 = vld [vmem:[%s3 + $0x8] sm:$0xff]
        %v910 = vld [vmem:[%s3 + $0x10] sm:$0xff]
        %v911 = vld [vmem:[%s3 + $0x18] sm:$0xff]
        %v912 = vld [vmem:[%s3 + $0x20] sm:$0xff]
        %v913 = vld [vmem:[%s3 + $0x28] sm:$0xff]
        %v914 = vld [vmem:[%s3 + $0x30] sm:$0xff]
        %v915 = vld [vmem:[%s3 + $0x38] sm:$0xff]
        %918 = vrot.lane.b32.xlu0 %v882, 96
        %v919 = vpop.permute.xlu0 %918
        %920 = vrot.lane.b32.xlu0 %v887, 96
        %v921 = vpop.permute.xlu0 %920
        %v923 = vsel %vm754, %v900, 0
        %v926 = vsel %vm754, %v901, 0
        %v929 = vsel %vm754, %v902, 0
        %v932 = vsel %vm754, %v903, 0
        %v935 = vsel %vm754, %v904, 0
        %v938 = vsel %vm754, %v905, 0
        %v941 = vsel %vm754, %v906, 0
        %v944 = vsel %vm754, %v907, 0
        %v946 = vsel %vm754, %v919, 0
        %v948 = vsel %vm754, %v921, 0
        %950 = vmatprep.subr.mxu0 0.0
        %951 = vmatpush1.xpose.msra.mxu0 %v946
        %952 = vmatprep.subr.mxu0 0.0
        %953 = vmatpush1.xpose.msra.mxu0 %v948
        %954 = vmatprep.subr.mxu0 0.0
        %955 = vmatpush1.xpose.msra.mxu0 0.0
        %956 = vmatprep.subr.mxu0 0.0
        %957 = vmatpush1.xpose.msra.mxu0 0.0
        %958 = vmatprep.subr.mxu0 0.0
        %959 = vmatpush1.xpose.msra.mxu0 0.0
        %960 = vmatprep.subr.mxu0 0.0
        %961 = vmatpush1.xpose.msra.mxu0 0.0
        %962 = vmatprep.subr.mxu0 0.0
        %963 = vmatpush1.xpose.msra.mxu0 0.0
        %964 = vmatprep.subr.mxu0 0.0
        %965 = vmatpush1.xpose.msra.mxu0 0.0
        %966 = vmatprep.subr.mxu0 0.0
        %967 = vmatpush1.xpose.msra.mxu0 0.0
        %968 = vmatprep.subr.mxu0 0.0
        %969 = vmatpush1.xpose.msra.mxu0 0.0
        %970 = vmatprep.subr.mxu0 0.0
        %971 = vmatpush1.xpose.msra.mxu0 0.0
        %972 = vmatprep.subr.mxu0 0.0
        %973 = vmatpush1.xpose.msra.mxu0 0.0
        %974 = vmatprep.subr.mxu0 0.0
        %975 = vmatpush1.xpose.msra.mxu0 0.0
        %976 = vmatprep.subr.mxu0 0.0
        %977 = vmatpush1.xpose.msra.mxu0 0.0
        %978 = vmatprep.subr.mxu0 0.0
        %979 = vmatpush1.xpose.msra.mxu0 0.0
        %980 = vmatprep.subr.mxu0 0.0
        %981 = vmatpush1.xpose.msra.mxu0 0.0
        %982 = vmatprep.subr.mxu0 0.0
        %983 = vmatpush1.xpose.msra.mxu0 0.0
        %984 = vmatprep.subr.mxu0 0.0
        %985 = vmatpush1.xpose.msra.mxu0 0.0
        %986 = vmatprep.subr.mxu0 0.0
        %987 = vmatpush1.xpose.msra.mxu0 0.0
        %988 = vmatprep.subr.mxu0 0.0
        %989 = vmatpush1.xpose.msra.mxu0 0.0
        %990 = vmatprep.subr.mxu0 0.0
        %991 = vmatpush1.xpose.msra.mxu0 0.0
        %992 = vmatprep.subr.mxu0 0.0
        %993 = vmatpush1.xpose.msra.mxu0 0.0
        %994 = vmatprep.subr.mxu0 0.0
        %995 = vmatpush1.xpose.msra.mxu0 0.0
        %996 = vmatprep.subr.mxu0 0.0
        %997 = vmatpush1.xpose.msra.mxu0 0.0
        %998 = vmatprep.subr.mxu0 0.0
        %999 = vmatpush1.xpose.msra.mxu0 0.0
        %1000 = vmatprep.subr.mxu0 0.0
        %1001 = vmatpush1.xpose.msra.mxu0 0.0
        %1002 = vmatprep.subr.mxu0 0.0
        %1003 = vmatpush1.xpose.msra.mxu0 0.0
        %1004 = vmatprep.subr.mxu0 0.0
        %1005 = vmatpush1.xpose.msra.mxu0 0.0
        %1006 = vmatprep.subr.mxu0 0.0
        %1007 = vmatpush1.xpose.msra.mxu0 0.0
        %1008 = vmatprep.subr.mxu0 0.0
        %1009 = vmatpush1.xpose.msra.mxu0 0.0
        %1010 = vmatprep.subr.mxu0 0.0
        %1011 = vmatpush1.xpose.msra.mxu0 0.0
        %1012 = vmatprep.subr.mxu0 0.0
        %1013 = vmatpush1.xpose.msra.mxu0 0.0
        %1014 = vmatprep.mubr.f32.mxu0 0.0
        %1015 = vmatmul.mubr.f32.gmra.mrb[0].mxu0 %v923
        %v1016 = vpop.f32.mrb[0].mxu0
        %v1017 = vadd.f32 %v908, %v1016
        %v1018 = vpop.f32.mrb[0].mxu0
        %1019 = vmatprep.mubr.f32.mxu0 0.0
        %1020 = vmatmul.mubr.f32.gmra.mrb[0].mxu0 %v926
        %v1021 = vpop.f32.mrb[0].mxu0
        %v1022 = vadd.f32 %v909, %v1021
        %v1023 = vpop.f32.mrb[0].mxu0
        %1024 = vmatprep.mubr.f32.mxu0 0.0
        %1025 = vmatmul.mubr.f32.gmra.mrb[0].mxu0 %v929
        %v1026 = vpop.f32.mrb[0].mxu0
        %v1027 = vadd.f32 %v910, %v1026
        %v1028 = vpop.f32.mrb[0].mxu0
        %1029 = vmatprep.mubr.f32.mxu0 0.0
        %1030 = vmatmul.mubr.f32.gmra.mrb[0].mxu0 %v932
        %v1031 = vpop.f32.mrb[0].mxu0
        %v1032 = vadd.f32 %v911, %v1031
        %v1033 = vpop.f32.mrb[0].mxu0
        %1034 = vmatprep.mubr.f32.mxu0 0.0
        %1035 = vmatmul.mubr.f32.gmra.mrb[0].mxu0 %v935
        %v1036 = vpop.f32.mrb[0].mxu0
        %v1037 = vadd.f32 %v912, %v1036
        %v1038 = vpop.f32.mrb[0].mxu0
        %1039 = vmatprep.mubr.f32.mxu0 0.0
        %1040 = vmatmul.mubr.f32.gmra.mrb[0].mxu0 %v938
        %v1041 = vpop.f32.mrb[0].mxu0
        %v1042 = vadd.f32 %v913, %v1041
        %v1043 = vpop.f32.mrb[0].mxu0
        %1044 = vmatprep.mubr.f32.mxu0 0.0
        %1045 = vmatmul.mubr.f32.gmra.mrb[0].mxu0 %v941
        %v1046 = vpop.f32.mrb[0].mxu0
        %v1047 = vadd.f32 %v914, %v1046
        %v1048 = vpop.f32.mrb[0].mxu0
        %1049 = vmatprep.mubr.f32.mxu0 0.0
        %1050 = vmatmul.mubr.f32.gmra.mrb[0].mxu0 %v944
        %v1051 = vpop.f32.mrb[0].mxu0
        %v1052 = vadd.f32 %v915, %v1051
        %v1053 = vpop.f32.mrb[0].mxu0
        %1054 = vdwg.mxu0
        %vm1055 = vcmask 130048
        %v1056 = vsel %vm1055, %v1017, -inf
        %1057 = vmax.xlane.f32.xlu0 %v1056
        %v1058 = vpop.xlane.xlu0 %1057
        %v1059 = vsel %vm1055, %v1022, -inf
        %1060 = vmax.xlane.f32.xlu0 %v1059
        %v1061 = vpop.xlane.xlu0 %1060
        %v1062 = vsel %vm1055, %v1027, -inf
        %1063 = vmax.xlane.f32.xlu0 %v1062
        %v1064 = vpop.xlane.xlu0 %1063
        %v1065 = vsel %vm1055, %v1032, -inf
        %1066 = vmax.xlane.f32.xlu0 %v1065
        %v1067 = vpop.xlane.xlu0 %1066
        %v1068 = vsel %vm1055, %v1037, -inf
        %1069 = vmax.xlane.f32.xlu0 %v1068
        %v1070 = vpop.xlane.xlu0 %1069
        %v1071 = vsel %vm1055, %v1042, -inf
        %1072 = vmax.xlane.f32.xlu0 %v1071
        %v1073 = vpop.xlane.xlu0 %1072
        %v1074 = vsel %vm1055, %v1047, -inf
        %1075 = vmax.xlane.f32.xlu0 %v1074
        %v1076 = vpop.xlane.xlu0 %1075
        %v1077 = vsel %vm1055, %v1052, -inf
        %1078 = vmax.xlane.f32.xlu0 %v1077
        %v1079 = vpop.xlane.xlu0 %1078
        %v1080 = vsub.f32 %v1017, %v1058
        %v1081 = vsub.f32 %v1022, %v1061
        %v1082 = vsub.f32 %v1027, %v1064
        %v1083 = vsub.f32 %v1032, %v1067
        %v1084 = vsub.f32 %v1037, %v1070
        %v1085 = vsub.f32 %v1042, %v1073
        %v1086 = vsub.f32 %v1047, %v1076
        %v1087 = vsub.f32 %v1052, %v1079
        %v1088 = vmul.f32 %v1080, 1.442695
        %v1089 = vpow.pop %v1088
        %v1090 = vmul.f32 %v1081, 1.442695
        %v1091 = vpow.pop %v1090
        %v1092 = vmul.f32 %v1082, 1.442695
        %v1093 = vpow.pop %v1092
        %v1094 = vmul.f32 %v1083, 1.442695
        %v1095 = vpow.pop %v1094
        %v1096 = vmul.f32 %v1084, 1.442695
        %v1097 = vpow.pop %v1096
        %v1098 = vmul.f32 %v1085, 1.442695
        %v1099 = vpow.pop %v1098
        %v1100 = vmul.f32 %v1086, 1.442695
        %v1101 = vpow.pop %v1100
        %v1102 = vmul.f32 %v1087, 1.442695
        %v1103 = vpow.pop %v1102
        %v1104 = vsel %vm1055, %v1089, 0.0
        %1105 = vadd.xlane.f32.xlu0 %v1104
        %v1106 = vpop.xlane.xlu0 %1105
        %v1107 = vsel %vm1055, %v1091, 0.0
        %1108 = vadd.xlane.f32.xlu0 %v1107
        %v1109 = vpop.xlane.xlu0 %1108
        %v1110 = vsel %vm1055, %v1093, 0.0
        %1111 = vadd.xlane.f32.xlu0 %v1110
        %v1112 = vpop.xlane.xlu0 %1111
        %v1113 = vsel %vm1055, %v1095, 0.0
        %1114 = vadd.xlane.f32.xlu0 %v1113
        %v1115 = vpop.xlane.xlu0 %1114
        %v1116 = vsel %vm1055, %v1097, 0.0
        %1117 = vadd.xlane.f32.xlu0 %v1116
        %v1118 = vpop.xlane.xlu0 %1117
        %v1119 = vsel %vm1055, %v1099, 0.0
        %1120 = vadd.xlane.f32.xlu0 %v1119
        %v1121 = vpop.xlane.xlu0 %1120
        %v1122 = vsel %vm1055, %v1101, 0.0
        %1123 = vadd.xlane.f32.xlu0 %v1122
        %v1124 = vpop.xlane.xlu0 %1123
        %v1125 = vsel %vm1055, %v1103, 0.0
        %1126 = vadd.xlane.f32.xlu0 %v1125
        %v1127 = vpop.xlane.xlu0 %1126
        %v1128 = vrcp.pop %v1106
        %v1129 = vmul.f32 1.0, %v1128
        %v1130 = vrcp.pop %v1109
        %v1131 = vmul.f32 1.0, %v1130
        %v1132 = vrcp.pop %v1112
        %v1133 = vmul.f32 1.0, %v1132
        %v1134 = vrcp.pop %v1115
        %v1135 = vmul.f32 1.0, %v1134
        %v1136 = vrcp.pop %v1118
        %v1137 = vmul.f32 1.0, %v1136
        %v1138 = vrcp.pop %v1121
        %v1139 = vmul.f32 1.0, %v1138
        %v1140 = vrcp.pop %v1124
        %v1141 = vmul.f32 1.0, %v1140
        %v1142 = vrcp.pop %v1127
        %v1143 = vmul.f32 1.0, %v1142
        %v1144 = vmul.f32 %v1089, %v1129
        %v1145 = vmul.f32 %v1091, %v1131
        %v1146 = vmul.f32 %v1093, %v1133
        %v1147 = vmul.f32 %v1095, %v1135
        %v1148 = vmul.f32 %v1097, %v1137
        %v1149 = vmul.f32 %v1099, %v1139
        %v1150 = vmul.f32 %v1101, %v1141
        %v1151 = vmul.f32 %v1103, %v1143
        %1152 = vrot.lane.b32.xlu0 %v882, 64
        %v1153 = vpop.permute.xlu0 %1152
        %1154 = vrot.lane.b32.xlu0 %v887, 64
        %v1155 = vpop.permute.xlu0 %1154
        %v1159 = vsel %vm1055, %v1144, 0
        %v1162 = vsel %vm1055, %v1145, 0
        %v1165 = vsel %vm1055, %v1146, 0
        %v1168 = vsel %vm1055, %v1147, 0
        %v1171 = vsel %vm1055, %v1148, 0
        %v1174 = vsel %vm1055, %v1149, 0
        %v1177 = vsel %vm1055, %v1150, 0
        %v1180 = vsel %vm1055, %v1151, 0
        %1182 = vmatprep.subr.mxu0 0.0
        %1183 = vmatpush1.msra.mxu0 %v1153
        %1184 = vmatprep.subr.mxu0 0.0
        %1185 = vmatpush1.msra.mxu0 %v1155
        %1186 = vmatprep.subr.mxu0 0.0
        %1187 = vmatpush1.msra.mxu0 0.0
        %1188 = vmatprep.subr.mxu0 0.0
        %1189 = vmatpush1.msra.mxu0 0.0
        %1190 = vmatprep.subr.mxu0 0.0
        %1191 = vmatpush1.msra.mxu0 0.0
        %1192 = vmatprep.subr.mxu0 0.0
        %1193 = vmatpush1.msra.mxu0 0.0
        %1194 = vmatprep.subr.mxu0 0.0
        %1195 = vmatpush1.msra.mxu0 0.0
        %1196 = vmatprep.subr.mxu0 0.0
        %1197 = vmatpush1.msra.mxu0 0.0
        %1198 = vmatprep.subr.mxu0 0.0
        %1199 = vmatpush1.msra.mxu0 0.0
        %1200 = vmatprep.subr.mxu0 0.0
        %1201 = vmatpush1.msra.mxu0 0.0
        %1202 = vmatprep.subr.mxu0 0.0
        %1203 = vmatpush1.msra.mxu0 0.0
        %1204 = vmatprep.subr.mxu0 0.0
        %1205 = vmatpush1.msra.mxu0 0.0
        %1206 = vmatprep.subr.mxu0 0.0
        %1207 = vmatpush1.msra.mxu0 0.0
        %1208 = vmatprep.subr.mxu0 0.0
        %1209 = vmatpush1.msra.mxu0 0.0
        %1210 = vmatprep.subr.mxu0 0.0
        %1211 = vmatpush1.msra.mxu0 0.0
        %1212 = vmatprep.subr.mxu0 0.0
        %1213 = vmatpush1.msra.mxu0 0.0
        %1214 = vmatprep.subr.mxu0 0.0
        %1215 = vmatpush1.msra.mxu0 0.0
        %1216 = vmatprep.subr.mxu0 0.0
        %1217 = vmatpush1.msra.mxu0 0.0
        %1218 = vmatprep.subr.mxu0 0.0
        %1219 = vmatpush1.msra.mxu0 0.0
        %1220 = vmatprep.subr.mxu0 0.0
        %1221 = vmatpush1.msra.mxu0 0.0
        %1222 = vmatprep.subr.mxu0 0.0
        %1223 = vmatpush1.msra.mxu0 0.0
        %1224 = vmatprep.subr.mxu0 0.0
        %1225 = vmatpush1.msra.mxu0 0.0
        %1226 = vmatprep.subr.mxu0 0.0
        %1227 = vmatpush1.msra.mxu0 0.0
        %1228 = vmatprep.subr.mxu0 0.0
        %1229 = vmatpush1.msra.mxu0 0.0
        %1230 = vmatprep.subr.mxu0 0.0
        %1231 = vmatpush1.msra.mxu0 0.0
        %1232 = vmatprep.subr.mxu0 0.0
        %1233 = vmatpush1.msra.mxu0 0.0
        %1234 = vmatprep.subr.mxu0 0.0
        %1235 = vmatpush1.msra.mxu0 0.0
        %1236 = vmatprep.subr.mxu0 0.0
        %1237 = vmatpush1.msra.mxu0 0.0
        %1238 = vmatprep.subr.mxu0 0.0
        %1239 = vmatpush1.msra.mxu0 0.0
        %1240 = vmatprep.subr.mxu0 0.0
        %1241 = vmatpush1.msra.mxu0 0.0
        %1242 = vmatprep.subr.mxu0 0.0
        %1243 = vmatpush1.msra.mxu0 0.0
        %1244 = vmatprep.subr.mxu0 0.0
        %1245 = vmatpush1.msra.mxu0 0.0
        %1246 = vmatprep.mubr.f32.mxu0 0.0
        %1247 = vmatmul.mubr.f32.gmra.mrb[0].mxu0 %v1159
        %v1248 = vpop.f32.mrb[0].mxu0
        %v1249 = vadd.f32 0.0, %v1248
        %v1250 = vpop.f32.mrb[0].mxu0
        %1251 = vmatprep.mubr.f32.mxu0 0.0
        %1252 = vmatmul.mubr.f32.gmra.mrb[0].mxu0 %v1162
        %v1253 = vpop.f32.mrb[0].mxu0
        %v1254 = vadd.f32 0.0, %v1253
        %v1255 = vpop.f32.mrb[0].mxu0
        %1256 = vmatprep.mubr.f32.mxu0 0.0
        %1257 = vmatmul.mubr.f32.gmra.mrb[0].mxu0 %v1165
        %v1258 = vpop.f32.mrb[0].mxu0
        %v1259 = vadd.f32 0.0, %v1258
        %v1260 = vpop.f32.mrb[0].mxu0
        %1261 = vmatprep.mubr.f32.mxu0 0.0
        %1262 = vmatmul.mubr.f32.gmra.mrb[0].mxu0 %v1168
        %v1263 = vpop.f32.mrb[0].mxu0
        %v1264 = vadd.f32 0.0, %v1263
        %v1265 = vpop.f32.mrb[0].mxu0
        %1266 = vmatprep.mubr.f32.mxu0 0.0
        %1267 = vmatmul.mubr.f32.gmra.mrb[0].mxu0 %v1171
        %v1268 = vpop.f32.mrb[0].mxu0
        %v1269 = vadd.f32 0.0, %v1268
        %v1270 = vpop.f32.mrb[0].mxu0
        %1271 = vmatprep.mubr.f32.mxu0 0.0
        %1272 = vmatmul.mubr.f32.gmra.mrb[0].mxu0 %v1174
        %v1273 = vpop.f32.mrb[0].mxu0
        %v1274 = vadd.f32 0.0, %v1273
        %v1275 = vpop.f32.mrb[0].mxu0
        %1276 = vmatprep.mubr.f32.mxu0 0.0
        %1277 = vmatmul.mubr.f32.gmra.mrb[0].mxu0 %v1177
        %v1278 = vpop.f32.mrb[0].mxu0
        %v1279 = vadd.f32 0.0, %v1278
        %v1280 = vpop.f32.mrb[0].mxu0
        %1281 = vmatprep.mubr.f32.mxu0 0.0
        %1282 = vmatmul.mubr.f32.gmra.mrb[0].mxu0 %v1180
        %v1283 = vpop.f32.mrb[0].mxu0
        %v1284 = vadd.f32 0.0, %v1283
        %v1285 = vpop.f32.mrb[0].mxu0
        %1286 = vdwg.mxu0
        %v1287 = vmul.f32 %v1249, %v890
        %v1288 = vmul.f32 %v1254, %v891
        %v1289 = vmul.f32 %v1259, %v892
        %v1290 = vmul.f32 %v1264, %v893
        %v1291 = vmul.f32 %v1269, %v894
        %v1292 = vmul.f32 %v1274, %v895
        %v1293 = vmul.f32 %v1279, %v896
        %v1294 = vmul.f32 %v1284, %v897
        %v1295 = vadd.f32 %v1287, %v1289
        %v1296 = vadd.f32 %v1288, %v1290
        %v1297 = vadd.f32 %v1295, %v1291
        %v1298 = vadd.f32 %v1296, %v1292
        %v1299 = vadd.f32 %v1297, %v1293
        %v1300 = vadd.f32 %v1298, %v1294
        %v1301 = vld [vmem:[%s715] sm:$0xff]
        %v1302 = vld [vmem:[%s715 + $0x8] sm:$0xff]
        %v1303 = vld [vmem:[%s715 + $0x10] sm:$0xff]
        %v1304 = vld [vmem:[%s715 + $0x18] sm:$0xff]
        %v1306 = vsel %vm754, %v1299, 0
        %v1309 = vsel %vm754, %v1300, 0
        %1311 = vmatprep.subr.mxu0 0.0
        %1312 = vmatpush1.msra.mxu0 %v1301
        %1313 = vmatprep.subr.mxu0 0.0
        %1314 = vmatpush1.msra.mxu0 %v1302
        %1315 = vmatprep.subr.mxu0 0.0
        %1316 = vmatpush1.msra.mxu0 %v1303
        %1317 = vmatprep.subr.mxu0 0.0
        %1318 = vmatpush1.msra.mxu0 %v1304
        %1319 = vmatprep.subr.mxu0 0.0
        %1320 = vmatpush1.msra.mxu0 0.0
        %1321 = vmatprep.subr.mxu0 0.0
        %1322 = vmatpush1.msra.mxu0 0.0
        %1323 = vmatprep.subr.mxu0 0.0
        %1324 = vmatpush1.msra.mxu0 0.0
        %1325 = vmatprep.subr.mxu0 0.0
        %1326 = vmatpush1.msra.mxu0 0.0
        %1327 = vmatprep.subr.mxu0 0.0
        %1328 = vmatpush1.msra.mxu0 0.0
        %1329 = vmatprep.subr.mxu0 0.0
        %1330 = vmatpush1.msra.mxu0 0.0
        %1331 = vmatprep.subr.mxu0 0.0
        %1332 = vmatpush1.msra.mxu0 0.0
        %1333 = vmatprep.subr.mxu0 0.0
        %1334 = vmatpush1.msra.mxu0 0.0
        %1335 = vmatprep.subr.mxu0 0.0
        %1336 = vmatpush1.msra.mxu0 0.0
        %1337 = vmatprep.subr.mxu0 0.0
        %1338 = vmatpush1.msra.mxu0 0.0
        %1339 = vmatprep.subr.mxu0 0.0
        %1340 = vmatpush1.msra.mxu0 0.0
        %1341 = vmatprep.subr.mxu0 0.0
        %1342 = vmatpush1.msra.mxu0 0.0
        %1343 = vmatprep.subr.mxu0 0.0
        %1344 = vmatpush1.msra.mxu0 0.0
        %1345 = vmatprep.subr.mxu0 0.0
        %1346 = vmatpush1.msra.mxu0 0.0
        %1347 = vmatprep.subr.mxu0 0.0
        %1348 = vmatpush1.msra.mxu0 0.0
        %1349 = vmatprep.subr.mxu0 0.0
        %1350 = vmatpush1.msra.mxu0 0.0
        %1351 = vmatprep.subr.mxu0 0.0
        %1352 = vmatpush1.msra.mxu0 0.0
        %1353 = vmatprep.subr.mxu0 0.0
        %1354 = vmatpush1.msra.mxu0 0.0
        %1355 = vmatprep.subr.mxu0 0.0
        %1356 = vmatpush1.msra.mxu0 0.0
        %1357 = vmatprep.subr.mxu0 0.0
        %1358 = vmatpush1.msra.mxu0 0.0
        %1359 = vmatprep.subr.mxu0 0.0
        %1360 = vmatpush1.msra.mxu0 0.0
        %1361 = vmatprep.subr.mxu0 0.0
        %1362 = vmatpush1.msra.mxu0 0.0
        %1363 = vmatprep.subr.mxu0 0.0
        %1364 = vmatpush1.msra.mxu0 0.0
        %1365 = vmatprep.subr.mxu0 0.0
        %1366 = vmatpush1.msra.mxu0 0.0
        %1367 = vmatprep.subr.mxu0 0.0
        %1368 = vmatpush1.msra.mxu0 0.0
        %1369 = vmatprep.subr.mxu0 0.0
        %1370 = vmatpush1.msra.mxu0 0.0
        %1371 = vmatprep.subr.mxu0 0.0
        %1372 = vmatpush1.msra.mxu0 0.0
        %1373 = vmatprep.subr.mxu0 0.0
        %1374 = vmatpush1.msra.mxu0 0.0
        %1375 = vmatprep.mubr.f32.mxu0 0.0
        %1376 = vmatmul.mubr.f32.gmra.mrb[0].mxu0 %v1306
        %v1377 = vpop.f32.mrb[0].mxu0
        %v1378 = vadd.f32 0.0, %v1377
        %v1379 = vpop.f32.mrb[0].mxu0
        %1380 = vmatprep.mubr.f32.mxu0 0.0
        %1381 = vmatmul.mubr.f32.gmra.mrb[0].mxu0 %v1309
        %v1382 = vpop.f32.mrb[0].mxu0
        %v1383 = vadd.f32 0.0, %v1382
        %v1384 = vpop.f32.mrb[0].mxu0
        %1385 = vdwg.mxu0
        %v1386 = vadd.f32 %v750, %v1378
        %v1387 = vadd.f32 %v751, %v1383
        %v1388 = vld [vmem:[%s718] sm:$0x1]
        %v1390 = vlaneseq
        %v1391 = vshrl.u32 %v1390, 7
        %v1392 = vsub.s32 0, %v1391
        %v1393 = vrot.slane %v1388, %v1392
        %v1395 = vadd.f32 %v1386, %v1393
        %v1396 = vadd.f32 %v1387, %v1393
        %v1397 = vld [vmem:[%s721] sm:$0x1]
        %v1398 = vld [vmem:[%s724] sm:$0x1]
        %v1399 = vsel %vm754, %v1395, 0.0
        %1400 = vadd.xlane.f32.xlu0 %v1399
        %v1401 = vpop.xlane.xlu0 %1400
        %v1402 = vsel %vm754, %v1396, 0.0
        %1403 = vadd.xlane.f32.xlu0 %v1402
        %v1404 = vpop.xlane.xlu0 %1403
        %v1405 = vmul.f32 %v1401, %v761
        %v1406 = vmul.f32 %v1404, %v761
        %v1407 = vsub.f32 %v1395, %v1405
        %v1408 = vsub.f32 %v1396, %v1406
        %v1409 = vmul.f32 %v1407, %v1407
        %v1410 = vmul.f32 %v1408, %v1408
        %v1411 = vsel %vm754, %v1409, 0.0
        %1412 = vadd.xlane.f32.xlu0 %v1411
        %v1413 = vpop.xlane.xlu0 %1412
        %v1414 = vsel %vm754, %v1410, 0.0
        %1415 = vadd.xlane.f32.xlu0 %v1414
        %v1416 = vpop.xlane.xlu0 %1415
        %v1417 = vmul.f32 %v1413, %v761
        %v1418 = vmul.f32 %v1416, %v761
        %v1419 = vadd.f32 %v1417, 1e-05
        %v1420 = vadd.f32 %v1418, 1e-05
        %v1421 = vrsqrt.pop %v1419
        %v1422 = vrsqrt.pop %v1420
        %v1423 = vmul.f32 %v1407, %v1421
        %v1424 = vmul.f32 %v1408, %v1422
        %v1426 = vlaneseq
        %v1427 = vshrl.u32 %v1426, 7
        %v1428 = vsub.s32 0, %v1427
        %v1429 = vrot.slane %v1397, %v1428
        %v1431 = vmul.f32 %v1423, %v1429
        %v1432 = vmul.f32 %v1424, %v1429
        %v1434 = vlaneseq
        %v1435 = vshrl.u32 %v1434, 7
        %v1436 = vsub.s32 0, %v1435
        %v1437 = vrot.slane %v1398, %v1436
        %v1439 = vadd.f32 %v1431, %v1437
        %v1440 = vadd.f32 %v1432, %v1437
        %v1441 = vld [vmem:[%s729] sm:$0xff]
        %v1442 = vld [vmem:[%s729 + $0x8] sm:$0xff]
        %v1443 = vld [vmem:[%s729 + $0x10] sm:$0xff]
        %v1444 = vld [vmem:[%s729 + $0x18] sm:$0xff]
        %v1445 = vld [vmem:[%s732] sm:$0x1]
        %v1447 = vlaneseq
        %v1448 = vshrl.u32 %v1447, 7
        %v1449 = vsub.s32 0, %v1448
        %v1450 = vrot.slane %v1445, %v1449
        %v1453 = vsel %vm754, %v1439, 0
        %v1456 = vsel %vm754, %v1440, 0
        %1458 = vmatprep.subr.mxu0 0.0
        %1459 = vmatpush1.msra.mxu0 %v1441
        %1460 = vmatprep.subr.mxu0 0.0
        %1461 = vmatpush1.msra.mxu0 %v1442
        %1462 = vmatprep.subr.mxu0 0.0
        %1463 = vmatpush1.msra.mxu0 %v1443
        %1464 = vmatprep.subr.mxu0 0.0
        %1465 = vmatpush1.msra.mxu0 %v1444
        %1466 = vmatprep.subr.mxu0 0.0
        %1467 = vmatpush1.msra.mxu0 0.0
        %1468 = vmatprep.subr.mxu0 0.0
        %1469 = vmatpush1.msra.mxu0 0.0
        %1470 = vmatprep.subr.mxu0 0.0
        %1471 = vmatpush1.msra.mxu0 0.0
        %1472 = vmatprep.subr.mxu0 0.0
        %1473 = vmatpush1.msra.mxu0 0.0
        %1474 = vmatprep.subr.mxu0 0.0
        %1475 = vmatpush1.msra.mxu0 0.0
        %1476 = vmatprep.subr.mxu0 0.0
        %1477 = vmatpush1.msra.mxu0 0.0
        %1478 = vmatprep.subr.mxu0 0.0
        %1479 = vmatpush1.msra.mxu0 0.0
        %1480 = vmatprep.subr.mxu0 0.0
        %1481 = vmatpush1.msra.mxu0 0.0
        %1482 = vmatprep.subr.mxu0 0.0
        %1483 = vmatpush1.msra.mxu0 0.0
        %1484 = vmatprep.subr.mxu0 0.0
        %1485 = vmatpush1.msra.mxu0 0.0
        %1486 = vmatprep.subr.mxu0 0.0
        %1487 = vmatpush1.msra.mxu0 0.0
        %1488 = vmatprep.subr.mxu0 0.0
        %1489 = vmatpush1.msra.mxu0 0.0
        %1490 = vmatprep.subr.mxu0 0.0
        %1491 = vmatpush1.msra.mxu0 0.0
        %1492 = vmatprep.subr.mxu0 0.0
        %1493 = vmatpush1.msra.mxu0 0.0
        %1494 = vmatprep.subr.mxu0 0.0
        %1495 = vmatpush1.msra.mxu0 0.0
        %1496 = vmatprep.subr.mxu0 0.0
        %1497 = vmatpush1.msra.mxu0 0.0
        %1498 = vmatprep.subr.mxu0 0.0
        %1499 = vmatpush1.msra.mxu0 0.0
        %1500 = vmatprep.subr.mxu0 0.0
        %1501 = vmatpush1.msra.mxu0 0.0
        %1502 = vmatprep.subr.mxu0 0.0
        %1503 = vmatpush1.msra.mxu0 0.0
        %1504 = vmatprep.subr.mxu0 0.0
        %1505 = vmatpush1.msra.mxu0 0.0
        %1506 = vmatprep.subr.mxu0 0.0
        %1507 = vmatpush1.msra.mxu0 0.0
        %1508 = vmatprep.subr.mxu0 0.0
        %1509 = vmatpush1.msra.mxu0 0.0
        %1510 = vmatprep.subr.mxu0 0.0
        %1511 = vmatpush1.msra.mxu0 0.0
        %1512 = vmatprep.subr.mxu0 0.0
        %1513 = vmatpush1.msra.mxu0 0.0
        %1514 = vmatprep.subr.mxu0 0.0
        %1515 = vmatpush1.msra.mxu0 0.0
        %1516 = vmatprep.subr.mxu0 0.0
        %1517 = vmatpush1.msra.mxu0 0.0
        %1518 = vmatprep.subr.mxu0 0.0
        %1519 = vmatpush1.msra.mxu0 0.0
        %1520 = vmatprep.subr.mxu0 0.0
        %1521 = vmatpush1.msra.mxu0 0.0
        %1522 = vmatprep.mubr.f32.mxu0 0.0
        %1523 = vmatmul.mubr.f32.gmra.mrb[0].mxu0 %v1453
        %v1524 = vpop.f32.mrb[0].mxu0
        %v1525 = vadd.f32 %v1450, %v1524
        %v1526 = vpop.f32.mrb[0].mxu0
        %1527 = vmatprep.mubr.f32.mxu0 0.0
        %1528 = vmatmul.mubr.f32.gmra.mrb[0].mxu0 %v1456
        %v1529 = vpop.f32.mrb[0].mxu0
        %v1530 = vadd.f32 %v1450, %v1529
        %v1531 = vpop.f32.mrb[0].mxu0
        %1532 = vdwg.mxu0
        %v1533 = vmul.f32 %v1525, 1.702
        %v1534 = vmul.f32 %v1530, 1.702
        %v1535 = vxor.u32 %v1533, 2147483648
        %v1536 = vxor.u32 %v1534, 2147483648
        %v1537 = vmul.f32 %v1535, 1.442695
        %v1538 = vpow.pop %v1537
        %v1539 = vmul.f32 %v1536, 1.442695
        %v1540 = vpow.pop %v1539
        %v1541 = vadd.f32 %v1538, 1.0
        %v1542 = vadd.f32 %v1540, 1.0
        %v1543 = vrcp.pop %v1541
        %v1544 = vmul.f32 1.0, %v1543
        %v1545 = vrcp.pop %v1542
        %v1546 = vmul.f32 1.0, %v1545
        %v1547 = vmul.f32 %v1525, %v1544
        %v1548 = vmul.f32 %v1530, %v1546
        %v1549 = vld [vmem:[%s737] sm:$0xff]
        %v1550 = vld [vmem:[%s737 + $0x8] sm:$0xff]
        %v1551 = vld [vmem:[%s737 + $0x10] sm:$0xff]
        %v1552 = vld [vmem:[%s737 + $0x18] sm:$0xff]
        %v1553 = vld [vmem:[%s737 + $0x20] sm:$0xff]
        %v1554 = vld [vmem:[%s737 + $0x28] sm:$0xff]
        %v1555 = vld [vmem:[%s737 + $0x30] sm:$0xff]
        %v1556 = vld [vmem:[%s737 + $0x38] sm:$0xff]
        %v1557 = vld [vmem:[%s737 + $0x40] sm:$0xff]
        %v1558 = vld [vmem:[%s737 + $0x48] sm:$0xff]
        %v1559 = vld [vmem:[%s737 + $0x50] sm:$0xff]
        %v1560 = vld [vmem:[%s737 + $0x58] sm:$0xff]
        %v1561 = vld [vmem:[%s737 + $0x60] sm:$0xff]
        %v1562 = vld [vmem:[%s737 + $0x68] sm:$0xff]
        %v1563 = vld [vmem:[%s737 + $0x70] sm:$0xff]
        %v1564 = vld [vmem:[%s737 + $0x78] sm:$0xff]
        %1565 = vmatprep.subr.mxu0 0.0
        %1566 = vmatpush1.msra.mxu0 %v1549
        %1567 = vmatprep.subr.mxu0 0.0
        %1568 = vmatpush1.msra.mxu0 %v1550
        %1569 = vmatprep.subr.mxu0 0.0
        %1570 = vmatpush1.msra.mxu0 %v1551
        %1571 = vmatprep.subr.mxu0 0.0
        %1572 = vmatpush1.msra.mxu0 %v1552
        %1573 = vmatprep.subr.mxu0 0.0
        %1574 = vmatpush1.msra.mxu0 %v1553
        %1575 = vmatprep.subr.mxu0 0.0
        %1576 = vmatpush1.msra.mxu0 %v1554
        %1577 = vmatprep.subr.mxu0 0.0
        %1578 = vmatpush1.msra.mxu0 %v1555
        %1579 = vmatprep.subr.mxu0 0.0
        %1580 = vmatpush1.msra.mxu0 %v1556
        %1581 = vmatprep.subr.mxu0 0.0
        %1582 = vmatpush1.msra.mxu0 %v1557
        %1583 = vmatprep.subr.mxu0 0.0
        %1584 = vmatpush1.msra.mxu0 %v1558
        %1585 = vmatprep.subr.mxu0 0.0
        %1586 = vmatpush1.msra.mxu0 %v1559
        %1587 = vmatprep.subr.mxu0 0.0
        %1588 = vmatpush1.msra.mxu0 %v1560
        %1589 = vmatprep.subr.mxu0 0.0
        %1590 = vmatpush1.msra.mxu0 %v1561
        %1591 = vmatprep.subr.mxu0 0.0
        %1592 = vmatpush1.msra.mxu0 %v1562
        %1593 = vmatprep.subr.mxu0 0.0
        %1594 = vmatpush1.msra.mxu0 %v1563
        %1595 = vmatprep.subr.mxu0 0.0
        %1596 = vmatpush1.msra.mxu0 %v1564
        %1597 = vmatprep.subr.mxu0 0.0
        %1598 = vmatpush1.msra.mxu0 0.0
        %1599 = vmatprep.subr.mxu0 0.0
        %1600 = vmatpush1.msra.mxu0 0.0
        %1601 = vmatprep.subr.mxu0 0.0
        %1602 = vmatpush1.msra.mxu0 0.0
        %1603 = vmatprep.subr.mxu0 0.0
        %1604 = vmatpush1.msra.mxu0 0.0
        %1605 = vmatprep.subr.mxu0 0.0
        %1606 = vmatpush1.msra.mxu0 0.0
        %1607 = vmatprep.subr.mxu0 0.0
        %1608 = vmatpush1.msra.mxu0 0.0
        %1609 = vmatprep.subr.mxu0 0.0
        %1610 = vmatpush1.msra.mxu0 0.0
        %1611 = vmatprep.subr.mxu0 0.0
        %1612 = vmatpush1.msra.mxu0 0.0
        %1613 = vmatprep.subr.mxu0 0.0
        %1614 = vmatpush1.msra.mxu0 0.0
        %1615 = vmatprep.subr.mxu0 0.0
        %1616 = vmatpush1.msra.mxu0 0.0
        %1617 = vmatprep.subr.mxu0 0.0
        %1618 = vmatpush1.msra.mxu0 0.0
        %1619 = vmatprep.subr.mxu0 0.0
        %1620 = vmatpush1.msra.mxu0 0.0
        %1621 = vmatprep.subr.mxu0 0.0
        %1622 = vmatpush1.msra.mxu0 0.0
        %1623 = vmatprep.subr.mxu0 0.0
        %1624 = vmatpush1.msra.mxu0 0.0
        %1625 = vmatprep.subr.mxu0 0.0
        %1626 = vmatpush1.msra.mxu0 0.0
        %1627 = vmatprep.subr.mxu0 0.0
        %1628 = vmatpush1.msra.mxu0 0.0
        %1629 = vmatprep.mubr.f32.mxu0 0.0
        %1630 = vmatmul.mubr.f32.gmra.mrb[0].mxu0 %v1547
        %v1631 = vpop.f32.mrb[0].mxu0
        %v1632 = vadd.f32 0.0, %v1631
        %v1633 = vpop.f32.mrb[0].mxu0
        %1634 = vmatprep.mubr.f32.mxu0 0.0
        %1635 = vmatmul.mubr.f32.gmra.mrb[0].mxu0 %v1548
        %v1636 = vpop.f32.mrb[0].mxu0
        %v1637 = vadd.f32 0.0, %v1636
        %v1638 = vpop.f32.mrb[0].mxu0
        %1639 = vdwg.mxu0
        %v1640 = vadd.f32 %v1395, %v1632
        %v1641 = vadd.f32 %v1396, %v1637
        %v1642 = vld [vmem:[%s740] sm:$0x1]
        %v1644 = vlaneseq
        %v1645 = vshrl.u32 %v1644, 7
        %v1646 = vsub.s32 0, %v1645
        %v1647 = vrot.slane %v1642, %v1646
        %v1649 = vadd.f32 %v1640, %v1647
        %v1650 = vadd.f32 %v1641, %v1647
        %1651 = vst.msk [vmem:[#allocation2] sm:$0xff] %vm754, %v1649
        %1652 = vst.msk [vmem:[#allocation2 + $0x8] sm:$0xff] %vm754, %v1650
        %p1653 = scmp.eq.s32.totalorder %s37, 1
        // Predicated region
        $region97: #{text_encoder.1} parent=91 // pred_check
          %p1654 = pneg %p1653
        $region98: #{text_encoder.1} parent=91 // pred_check_branch
          %1656 = sbr.rel (%p1654) target = $region100
        $region99: #{text_encoder.1} parent=91 // pred_region
          %s1657 = sld [smem:[#allocation4]]
          %s1658 = scalar_lea.vmem [#allocation2], %s1657
          %v1659 = vld [vmem:[%s1658] sm:$0x1]
          %s1660 = sld [smem:[#allocation4 + $0x1]]
          %s1661 = sadd.s32 %s1660, 8
          %s1662 = scalar_lea.vmem [#allocation2], %s1661
          %v1663 = vld [vmem:[%s1662] sm:$0x1]
          %v1665 = vrot.slane %v1663, 7
          %vm1667 = vcmask 1040384
          %v1668 = vsel %vm1667, %v1659, %v1665
          %v1669 = vld [vmem:[%s16] sm:$0x1]
          %v1670 = vld [vmem:[%s17] sm:$0x1]
          %vm1671 = vcmask 254976
          %v1672 = vsel %vm1671, %v1668, 0.0
          %1673 = vadd.xlane.f32.xlu0 %v1672
          %v1674 = vpop.xlane.xlu0 %1673
          %v1675 = vmul.f32 %v1674, %v761
          %v1676 = vsub.f32 %v1668, %v1675
          %v1677 = vmul.f32 %v1676, %v1676
          %v1678 = vsel %vm1671, %v1677, 0.0
          %1679 = vadd.xlane.f32.xlu0 %v1678
          %v1680 = vpop.xlane.xlu0 %1679
          %v1681 = vmul.f32 %v1680, %v761
          %v1682 = vadd.f32 %v1681, 1e-05
          %v1683 = vrsqrt.pop %v1682
          %v1684 = vmul.f32 %v1676, %v1683
          %v1686 = vlaneseq
          %v1687 = vshrl.u32 %v1686, 7
          %v1688 = vsub.s32 0, %v1687
          %v1689 = vrot.slane %v1669, %v1688
          %v1691 = vmul.f32 %v1684, %v1689
          %v1693 = vlaneseq
          %v1694 = vshrl.u32 %v1693, 7
          %v1695 = vsub.s32 0, %v1694
          %v1696 = vrot.slane %v1670, %v1695
          %v1698 = vadd.f32 %v1691, %v1696
          %v1699 = vld [vmem:[%s18] sm:$0xff]
          %v1700 = vld [vmem:[%s18 + $0x8] sm:$0xff]
          %v1701 = vld [vmem:[%s18 + $0x10] sm:$0xff]
          %v1702 = vld [vmem:[%s18 + $0x18] sm:$0xff]
          %v1704 = vsel %vm754, %v1698, 0
          %1706 = vmatprep.subr.mxu0 0.0
          %1707 = vmatpush1.msra.mxu0 %v1699
          %1708 = vmatprep.subr.mxu0 0.0
          %1709 = vmatpush1.msra.mxu0 %v1700
          %1710 = vmatprep.subr.mxu0 0.0
          %1711 = vmatpush1.msra.mxu0 %v1701
          %1712 = vmatprep.subr.mxu0 0.0
          %1713 = vmatpush1.msra.mxu0 %v1702
          %1714 = vmatprep.subr.mxu0 0.0
          %1715 = vmatpush1.msra.mxu0 0.0
          %1716 = vmatprep.subr.mxu0 0.0
          %1717 = vmatpush1.msra.mxu0 0.0
          %1718 = vmatprep.subr.mxu0 0.0
          %1719 = vmatpush1.msra.mxu0 0.0
          %1720 = vmatprep.subr.mxu0 0.0
          %1721 = vmatpush1.msra.mxu0 0.0
          %1722 = vmatprep.subr.mxu0 0.0
          %1723 = vmatpush1.msra.mxu0 0.0
          %1724 = vmatprep.subr.mxu0 0.0
          %1725 = vmatpush1.msra.mxu0 0.0
          %1726 = vmatprep.subr.mxu0 0.0
          %1727 = vmatpush1.msra.mxu0 0.0
          %1728 = vmatprep.subr.mxu0 0.0
          %1729 = vmatpush1.msra.mxu0 0.0
          %1730 = vmatprep.subr.mxu0 0.0
          %1731 = vmatpush1.msra.mxu0 0.0
          %1732 = vmatprep.subr.mxu0 0.0
          %1733 = vmatpush1.msra.mxu0 0.0
          %1734 = vmatprep.subr.mxu0 0.0
          %1735 = vmatpush1.msra.mxu0 0.0
          %1736 = vmatprep.subr.mxu0 0.0
          %1737 = vmatpush1.msra.mxu0 0.0
          %1738 = vmatprep.subr.mxu0 0.0
          %1739 = vmatpush1.msra.mxu0 0.0
          %1740 = vmatprep.subr.mxu0 0.0
          %1741 = vmatpush1.msra.mxu0 0.0
          %1742 = vmatprep.subr.mxu0 0.0
          %1743 = vmatpush1.msra.mxu0 0.0
          %1744 = vmatprep.subr.mxu0 0.0
          %1745 = vmatpush1.msra.mxu0 0.0
          %1746 = vmatprep.subr.mxu0 0.0
          %1747 = vmatpush1.msra.mxu0 0.0
          %1748 = vmatprep.subr.mxu0 0.0
          %1749 = vmatpush1.msra.mxu0 0.0
          %1750 = vmatprep.subr.mxu0 0.0
          %1751 = vmatpush1.msra.mxu0 0.0
          %1752 = vmatprep.subr.mxu0 0.0
          %1753 = vmatpush1.msra.mxu0 0.0
          %1754 = vmatprep.subr.mxu0 0.0
          %1755 = vmatpush1.msra.mxu0 0.0
          %1756 = vmatprep.subr.mxu0 0.0
          %1757 = vmatpush1.msra.mxu0 0.0
          %1758 = vmatprep.subr.mxu0 0.0
          %1759 = vmatpush1.msra.mxu0 0.0
          %1760 = vmatprep.subr.mxu0 0.0
          %1761 = vmatpush1.msra.mxu0 0.0
          %1762 = vmatprep.subr.mxu0 0.0
          %1763 = vmatpush1.msra.mxu0 0.0
          %1764 = vmatprep.subr.mxu0 0.0
          %1765 = vmatpush1.msra.mxu0 0.0
          %1766 = vmatprep.subr.mxu0 0.0
          %1767 = vmatpush1.msra.mxu0 0.0
          %1768 = vmatprep.subr.mxu0 0.0
          %1769 = vmatpush1.msra.mxu0 0.0
          %1770 = vmatprep.mubr.f32.mxu0 0.0
          %1771 = vmatmul.mubr.f32.gmra.mrb[0].mxu0 %v1704
          %v1772 = vpop.f32.mrb[0].mxu0
          %v1773 = vadd.f32 0.0, %v1772
          %v1774 = vpop.f32.mrb[0].mxu0
          %1775 = vdwg.mxu0
          %1776 = vst [vmem:[#allocation5] sm:$0x3] %v1773
        $region100: #{text_encoder.1} parent=91 // pred_fallthru
          _
        // Predicated region
        $region101: #{text_encoder.1} parent=91 // pred_check
          %p1777 = pneg %p488
        $region102: #{text_encoder.1} parent=91 // pred_check_branch
          %1779 = sbr.rel (%p1777) target = $region104
        $region103: #{text_encoder.1} parent=91 // pred_region
          %s1781 = ssub.s32 32, 32
          %1782 = vsyncadd [#allocation6], %s1781
          %s1784 = sshll.u32 [#allocation5], 4
          %s1785 = int_to_ptr.vmem [resolvable:$true] %s1784
          %1787 = dma.vmem_to_hbm [thread:$0]  %s1785, 32, %s19, [#allocation6]
        $region104: #{text_encoder.1} parent=91 // pred_fallthru
          _
        // Predicated region
        $region105: #{text_encoder.1} parent=91 // pred_check
          %p1788 = pneg %p488
        $region106: #{text_encoder.1} parent=91 // pred_check_branch
          %1790 = sbr.rel (%p1788) target = $region108
        $region107: #{text_encoder.1} parent=91 // pred_region
          %1791 = dma.done [#allocation6], 32
        $region108: #{text_encoder.1} parent=91 // pred_fallthru
          _
      $region92: #{text_encoder.1} parent=5 // pred_fallthru
        _
      %p1792 = scmp.le.s32.totalorder 2, %s32
      // Predicated region
      $region109: #{text_encoder.1} parent=5 // pred_check
        %p1793 = pneg %p1792
      $region110: #{text_encoder.1} parent=5 // pred_check_branch
        %1795 = sbr.rel (%p1793) target = $region112
      $region111: #{text_encoder.1} parent=5 // pred_region
        %s1796 = ssub.s32 %s32, 2
      $region112: #{text_encoder.1} parent=5 // pred_fallthru
        _
    $region6: #{text_encoder.1} parent=1 // loop_footer
      %s36 = sadd.s32 1, %s32
    $region7: #{text_encoder.1} parent=1 // loop_footer_branch
      %31 = sbr.rel target = $region3
    $region8: #{text_encoder.1} parent=1 // loop_exit
      _
    %1797 = vsyncpa [#allocation6], 1
    %s1798 = scalar_lea.sflag [#allocation6], 1
    %1799 = vsyncpa %s1798, 1

</llo_original>
